<compile_context>
chip_gen: v5e
topology: v5e:2x2
jax: 0.10.0
libtpu: 0.0.40
codegen_flags: <defaults>
</compile_context>

<pallas_src>
import jax
import jax.numpy as jnp
from jax import lax
from jax.experimental import pallas as pl
from jax.experimental.pallas import tpu as pltpu


def _round_up(v, m):
    return (v + m - 1) // m * m


def _vmem_budget_bytes():
    # Generation-aware budget: ~75% of physical VMEM, leaving headroom for
    # compiler-internal scratch (v7x: 64 MiB -> ~48 MiB; v5e/v6e: 128 MiB -> ~96 MiB).
    try:
        cap = int(pltpu.get_tpu_info().vmem_capacity_bytes)
    except Exception:
        cap = 64 * 2**20  # conservative fallback (v7x-sized)
    return cap * 3 // 4


def make_spatial_attention(N, C, D, H, W, kernel_size=3, c_block=None):
    assert kernel_size in (3, 7), "kernel size must be 3 or 7"
    K = kernel_size
    pad = 3 if K == 7 else 1
    Dp, Hp = D + 2 * pad, H + 2 * pad
    HW = H * W
    # Flat (h*W + w) padded axis.  Height padding = pad*W contiguous zeros before/after
    # the real data; an extra +/- pad of slack absorbs the kw lane shift so every tap is
    # a static, in-bounds slice of length H*W.
    L = Hp * W + 2 * pad
    j0 = pad + pad * W  # interior start on the flat axis

    # ---- layout-aware VMEM sizing (sublane dim -> multiple of 8, lane dim -> 128) ----
    HW_l = _round_up(HW, 128)
    D_s = _round_up(D, 8)
    feat_bytes = 2 * _round_up(Dp, 8) * _round_up(L, 128) * 4
    out_block_bytes = D_s * HW_l * 4
    budget = _vmem_budget_bytes()

    if c_block is None:
        # Largest channel block (divisor of C) whose double-buffered input block plus
        # scratch fits the budget: fewer grid steps -> less per-step overhead (~0.35us),
        # bigger and more efficient DMAs for the strided NC(D)HW layout.
        c_block = 1
        for d in range(1, C + 1):
            if C % d:
                continue
            need = 2 * d * D_s * HW_l * 4 + 2 * out_block_bytes + feat_bytes + (4 << 20)
            if need <= budget:
                c_block = d
    assert C % c_block == 0, "C must be divisible by c_block"
    n_cblocks = C // c_block

    def kernel(w_ref, x_ref, o_ref, feat_ref):
        # w_ref   : (2*K*K*K,) f32 in SMEM (scalar prefetch; avg branch pre-scaled 1/C)
        # x_ref   : (1, c_block, D, H*W) VMEM block (native dtype, lane-dense)
        # o_ref   : (1, 1, D, H*W) VMEM output block (lane-dense store)
        # feat_ref: (2, Dp, L) f32 scratch: depth/height zero-padded [sum, max] feature,
        #           accumulated in place across channel blocks (no separate red_ref).
        cb = pl.program_id(1)
        ncb = pl.num_programs(1)

        # --- fused single-pass partial [sum, max] over this channel block ------------
        x0 = x_ref[0, 0].astype(jnp.float32)  # (D, H*W)
        if c_block <= 8:
            psum = x0
            pmax = x0
            for c in range(1, c_block):
                xc = x_ref[0, c].astype(jnp.float32)
                psum = psum + xc
                pmax = jnp.maximum(pmax, xc)
        else:
            def body(c, carry):
                s, m = carry
                xc = x_ref[0, c].astype(jnp.float32)
                return s + xc, jnp.maximum(m, xc)
            psum, pmax = lax.fori_loop(1, c_block, body, (x0, x0), unroll=4)

        @pl.when(cb == 0)
        def _init():
            feat_ref[...] = jnp.zeros_like(feat_ref)           # zero the halo once
            feat_ref[0, pad:pad + D, j0:j0 + HW] = psum
            feat_ref[1, pad:pad + D, j0:j0 + HW] = pmax

        @pl.when(cb > 0)
        def _accumulate():
            cur_s = feat_ref[0, pad:pad + D, j0:j0 + HW]
            cur_m = feat_ref[1, pad:pad + D, j0:j0 + HW]
            feat_ref[0, pad:pad + D, j0:j0 + HW] = cur_s + psum
            feat_ref[1, pad:pad + D, j0:j0 + HW] = jnp.maximum(cur_m, pmax)

        # --- last channel block: flat-axis 3D conv + sigmoid + lane-dense store ------
        @pl.when(cb == ncb - 1)
        def _finalize():
            # K lane masks fixing W-boundary wraparound of the kw shift on the flat axis
            col = lax.broadcasted_iota(jnp.int32, (1, HW), 1) % W
            masks = []
            for kw in range(K):
                dw = kw - pad
                valid = jnp.logical_and(col + dw >= 0, col + dw < W)
                masks.append(valid.astype(jnp.float32))

            n_acc = 4  # match the 4 VALU slots; bounds live vregs
            accs = [jnp.zeros((D, HW), jnp.float32) for _ in range(n_acc)]
            t = 0
            for c in range(2):
                for kh in range(K):
                    for kw in range(K):
                        start = kh * W + kw
                        sl = feat_ref[c, :, start:start + HW] * masks[kw]  # (Dp, HW)
                        for kd in range(K):
                            widx = ((c * K + kd) * K + kh) * K + kw
                            accs[t % n_acc] = accs[t % n_acc] + w_ref[widx] * sl[kd:kd + D, :]
                            t += 1

            acc = (accs[0] + accs[1]) + (accs[2] + accs[3])
            o_ref[0, 0] = jax.nn.sigmoid(acc).astype(o_ref.dtype)

    def forward(x, weight):
        # x: (N, C, D, H, W); weight: (1, 2, K, K, K) (OIDHW, bias=False)
        assert x.shape == (N, C, D, H, W)
        # Fold 1/C into the avg-branch weights so the kernel only needs a channel sum.
        w = weight.astype(jnp.float32).reshape(2, K, K, K)
        scale = jnp.array([1.0 / C, 1.0], jnp.float32).reshape(2, 1, 1, 1)
        w_flat = (w * scale).reshape(-1)  # (2*K*K*K,)

        itemsize = jnp.dtype(x.dtype).itemsize
        in_block = c_block * D_s * HW_l * itemsize
        out_block = D_s * HW_l * itemsize
        need = 2 * in_block + 2 * out_block + feat_bytes          # double-buffered I/O
        vmem_limit = int(min(budget, max(2 * need + (8 << 20), 16 << 20)))

        x_flat = x.reshape(N, C, D, HW)  # lane-dense minor dim for the kernel (free)

        out_flat = pl.pallas_call(
            kernel,
            out_shape=jax.ShapeDtypeStruct((N, 1, D, HW), x.dtype),
            grid_spec=pltpu.PrefetchScalarGridSpec(
                num_scalar_prefetch=1,                            # conv weights -> SMEM once
                grid=(N, n_cblocks),                              # batch x channel-blocks
                in_specs=[
                    pl.BlockSpec((1, c_block, D, HW),
                                 lambda n, cb, wp: (n, cb, 0, 0)),
                ],
                out_specs=pl.BlockSpec((1, 1, D, HW),
                                       lambda n, cb, wp: (n, 0, 0, 0)),
                scratch_shapes=[
                    pltpu.VMEM((2, Dp, L), jnp.float32),          # padded [sum, max] feature
                ],
            ),
            compiler_params=pltpu.CompilerParams(
                dimension_semantics=("parallel", "arbitrary"),
                vmem_limit_bytes=vmem_limit,
            ),
        )(w_flat, x_flat)

        return out_flat.reshape(N, 1, D, H, W)

    return forward


def reference_forward(x, weight, pad=1):
    # Pure-JAX reference mirroring the PyTorch module.
    x = x.astype(jnp.float32)
    avg = jnp.mean(x, axis=1, keepdims=True)
    mx = jnp.max(x, axis=1, keepdims=True)
    feat = jnp.concatenate([avg, mx], axis=1)          # (N, 2, D, H, W)
    y = lax.conv_general_dilated(
        feat, weight.astype(jnp.float32),
        window_strides=(1, 1, 1),
        padding=[(pad, pad)] * 3,
        dimension_numbers=("NCDHW", "OIDHW", "NCDHW"),
    )
    return jax.nn.sigmoid(y)


if __name__ == "__main__":
    N, C, D, H, W = 2, 4, 4, 8, 16
    K = 3

    key = jax.random.PRNGKey(0)
    kx, kw_key = jax.random.split(key)
    x = jax.random.normal(kx, (N, C, D, H, W), dtype=jnp.float32)
    # deterministic synthetic Conv3d(2, 1, 3, padding=1, bias=False) weight
    weight = 0.1 * jax.random.normal(kw_key, (1, 2, K, K, K), dtype=jnp.float32)

    ref = jax.block_until_ready(reference_forward(x, weight))

    # Auto c_block: largest fitting block (here the full C) -> single channel block.
    fwd = make_spatial_attention(N, C, D, H, W, kernel_size=K)
    out = jax.block_until_ready(fwd(x, weight))
    assert out.shape == (N, 1, D, H, W)
    assert jnp.allclose(out, ref, atol=1e-5, rtol=1e-5), "mismatch vs reference (auto c_block)"

    # Forced c_block=2 -> exercises the cross-channel-block running sum/max path.
    fwd2 = make_spatial_attention(N, C, D, H, W, kernel_size=K, c_block=2)
    out2 = jax.block_until_ready(fwd2(x, weight))
    assert jnp.allclose(out2, ref, atol=1e-5, rtol=1e-5), "mismatch vs reference (c_block=2)"

    print("KERNEL_OK")
</pallas_src>

<mosaic_0001>
module attributes {stable_mosaic.version = 11 : i64} {
  func.func @kernel(%arg0: i32, %arg1: i32, %arg2: memref<54xf32, #tpu.memory_space<smem>>, %arg3: memref<1x4x4x128xf32, #tpu.memory_space<vmem>>, %arg4: memref<1x1x4x128xf32, #tpu.memory_space<vmem>>, %arg5: memref<2x6x162xf32, #tpu.memory_space<vmem>>) attributes {dimension_semantics = [#tpu.dimension_semantics<parallel>, #tpu.dimension_semantics<arbitrary>], iteration_bounds = array<i64: 2, 1>, scalar_prefetch = 1 : i64, scratch_operands = 1 : i64, tpu.core_type = #tpu.core_type<tc>, window_params = [{transform_indices = @transform_0, window_bounds = array<i64: 1, 4, 4, 128>}, {transform_indices = @transform_1, window_bounds = array<i64: 1, 1, 4, 128>}]} {
    %c0 = arith.constant 0 : index
    %c0_0 = arith.constant 0 : index
    %c0_1 = arith.constant 0 : index
    %c0_2 = arith.constant 0 : index
    %0 = vector.load %arg3[%c0, %c0_0, %c0_1, %c0_2] : memref<1x4x4x128xf32, #tpu.memory_space<vmem>>, vector<1x1x4x128xf32>
    %1 = vector.shape_cast %0 : vector<1x1x4x128xf32> to vector<4x128xf32>
    %c0_3 = arith.constant 0 : index
    %c1 = arith.constant 1 : index
    %c0_4 = arith.constant 0 : index
    %c0_5 = arith.constant 0 : index
    %2 = vector.load %arg3[%c0_3, %c1, %c0_4, %c0_5] : memref<1x4x4x128xf32, #tpu.memory_space<vmem>>, vector<1x1x4x128xf32>
    %3 = vector.shape_cast %2 : vector<1x1x4x128xf32> to vector<4x128xf32>
    %4 = arith.addf %1, %3 : vector<4x128xf32>
    %5 = arith.maximumf %1, %3 : vector<4x128xf32>
    %c0_6 = arith.constant 0 : index
    %c2 = arith.constant 2 : index
    %c0_7 = arith.constant 0 : index
    %c0_8 = arith.constant 0 : index
    %6 = vector.load %arg3[%c0_6, %c2, %c0_7, %c0_8] : memref<1x4x4x128xf32, #tpu.memory_space<vmem>>, vector<1x1x4x128xf32>
    %7 = vector.shape_cast %6 : vector<1x1x4x128xf32> to vector<4x128xf32>
    %8 = arith.addf %4, %7 : vector<4x128xf32>
    %9 = arith.maximumf %5, %7 : vector<4x128xf32>
    %c0_9 = arith.constant 0 : index
    %c3 = arith.constant 3 : index
    %c0_10 = arith.constant 0 : index
    %c0_11 = arith.constant 0 : index
    %10 = vector.load %arg3[%c0_9, %c3, %c0_10, %c0_11] : memref<1x4x4x128xf32, #tpu.memory_space<vmem>>, vector<1x1x4x128xf32>
    %11 = vector.shape_cast %10 : vector<1x1x4x128xf32> to vector<4x128xf32>
    %12 = arith.addf %8, %11 : vector<4x128xf32>
    %13 = arith.maximumf %9, %11 : vector<4x128xf32>
    %c0_i32 = arith.constant 0 : i32
    %14 = arith.cmpi eq, %arg1, %c0_i32 : i32
    %15 = arith.extui %14 : i1 to i32
    %c0_i32_12 = arith.constant 0 : i32
    %16 = arith.cmpi ne, %15, %c0_i32_12 : i32
    scf.if %16 {
      %cst = arith.constant 0.000000e+00 : f32
      %23 = vector.broadcast %cst : f32 to vector<2x6x162xf32>
      %c0_17 = arith.constant 0 : index
      %c0_18 = arith.constant 0 : index
      %c0_19 = arith.constant 0 : index
      %24 = vector.load %arg5[%c0_17, %c0_18, %c0_19] : memref<2x6x162xf32, #tpu.memory_space<vmem>>, vector<2x6x162xf32>
      tpu.vector_store %arg5[%c0_17, %c0_18, %c0_19], %23 {strides = array<i32>} : memref<2x6x162xf32, #tpu.memory_space<vmem>>, vector<2x6x162xf32>,
      %c0_20 = arith.constant 0 : index
      %c1_21 = arith.constant 1 : index
      %c17 = arith.constant 17 : index
      %25 = vector.load %arg5[%c0_20, %c1_21, %c17] : memref<2x6x162xf32, #tpu.memory_space<vmem>>, vector<1x4x128xf32>
      %26 = vector.shape_cast %25 : vector<1x4x128xf32> to vector<4x128xf32>
      %27 = vector.shape_cast %12 : vector<4x128xf32> to vector<1x4x128xf32>
      tpu.vector_store %arg5[%c0_20, %c1_21, %c17], %27 {strides = array<i32>} : memref<2x6x162xf32, #tpu.memory_space<vmem>>, vector<1x4x128xf32>,
      %c1_22 = arith.constant 1 : index
      %c1_23 = arith.constant 1 : index
      %c17_24 = arith.constant 17 : index
      %28 = vector.load %arg5[%c1_22, %c1_23, %c17_24] : memref<2x6x162xf32, #tpu.memory_space<vmem>>, vector<1x4x128xf32>
      %29 = vector.shape_cast %28 : vector<1x4x128xf32> to vector<4x128xf32>
      %30 = vector.shape_cast %13 : vector<4x128xf32> to vector<1x4x128xf32>
      tpu.vector_store %arg5[%c1_22, %c1_23, %c17_24], %30 {strides = array<i32>} : memref<2x6x162xf32, #tpu.memory_space<vmem>>, vector<1x4x128xf32>,
    } else {
    }
    %c0_i32_13 = arith.constant 0 : i32
    %17 = arith.cmpi sgt, %arg1, %c0_i32_13 : i32
    %18 = arith.extui %17 : i1 to i32
    %c0_i32_14 = arith.constant 0 : i32
    %19 = arith.cmpi ne, %18, %c0_i32_14 : i32
    scf.if %19 {
      %c0_17 = arith.constant 0 : index
      %c1_18 = arith.constant 1 : index
      %c17 = arith.constant 17 : index
      %23 = vector.load %arg5[%c0_17, %c1_18, %c17] : memref<2x6x162xf32, #tpu.memory_space<vmem>>, vector<1x4x128xf32>
      %24 = vector.shape_cast %23 : vector<1x4x128xf32> to vector<4x128xf32>
      %c1_19 = arith.constant 1 : index
      %c1_20 = arith.constant 1 : index
      %c17_21 = arith.constant 17 : index
      %25 = vector.load %arg5[%c1_19, %c1_20, %c17_21] : memref<2x6x162xf32, #tpu.memory_space<vmem>>, vector<1x4x128xf32>
      %26 = vector.shape_cast %25 : vector<1x4x128xf32> to vector<4x128xf32>
      %27 = arith.addf %24, %12 : vector<4x128xf32>
      %c0_22 = arith.constant 0 : index
      %c1_23 = arith.constant 1 : index
      %c17_24 = arith.constant 17 : index
      %28 = vector.load %arg5[%c0_22, %c1_23, %c17_24] : memref<2x6x162xf32, #tpu.memory_space<vmem>>, vector<1x4x128xf32>
      %29 = vector.shape_cast %28 : vector<1x4x128xf32> to vector<4x128xf32>
      %30 = vector.shape_cast %27 : vector<4x128xf32> to vector<1x4x128xf32>
      tpu.vector_store %arg5[%c0_22, %c1_23, %c17_24], %30 {strides = array<i32>} : memref<2x6x162xf32, #tpu.memory_space<vmem>>, vector<1x4x128xf32>,
      %31 = arith.maximumf %26, %13 : vector<4x128xf32>
      %c1_25 = arith.constant 1 : index
      %c1_26 = arith.constant 1 : index
      %c17_27 = arith.constant 17 : index
      %32 = vector.load %arg5[%c1_25, %c1_26, %c17_27] : memref<2x6x162xf32, #tpu.memory_space<vmem>>, vector<1x4x128xf32>
      %33 = vector.shape_cast %32 : vector<1x4x128xf32> to vector<4x128xf32>
      %34 = vector.shape_cast %31 : vector<4x128xf32> to vector<1x4x128xf32>
      tpu.vector_store %arg5[%c1_25, %c1_26, %c17_27], %34 {strides = array<i32>} : memref<2x6x162xf32, #tpu.memory_space<vmem>>, vector<1x4x128xf32>,
    } else {
    }
    %c0_i32_15 = arith.constant 0 : i32
    %20 = arith.cmpi eq, %arg1, %c0_i32_15 : i32
    %21 = arith.extui %20 : i1 to i32
    %c0_i32_16 = arith.constant 0 : i32
    %22 = arith.cmpi ne, %21, %c0_i32_16 : i32
    scf.if %22 {
      %23 = tpu.iota {dimensions = array<i32: 1>} : vector<1x128xi32>
      %c16_i32 = arith.constant 16 : i32
      %c0_i32_17 = arith.constant 0 : i32
      %24 = arith.cmpi eq, %c16_i32, %c0_i32_17 : i32
      %c1_i32 = arith.constant 1 : i32
      %25 = arith.select %24, %c1_i32, %c16_i32 : i32
      %26 = vector.broadcast %25 : i32 to vector<1x128xi32>
      %27 = arith.remsi %23, %26 : vector<1x128xi32>
      %c0_i32_18 = arith.constant 0 : i32
      %28 = vector.broadcast %c0_i32_18 : i32 to vector<1x128xi32>
      %29 = arith.cmpi ne, %27, %28 : vector<1x128xi32>
      %c0_i32_19 = arith.constant 0 : i32
      %30 = vector.broadcast %c0_i32_19 : i32 to vector<1x128xi32>
      %31 = arith.cmpi slt, %27, %30 : vector<1x128xi32>
      %c0_i32_20 = arith.constant 0 : i32
      %32 = arith.cmpi slt, %25, %c0_i32_20 : i32
      %33 = vector.broadcast %32 : i1 to vector<1x128xi1>
      %34 = vector.broadcast %33 : vector<1x128xi1> to vector<1x128xi1>
      %35 = arith.xori %31, %34 : vector<1x128xi1>
      %36 = arith.andi %35, %29 : vector<1x128xi1>
      %37 = vector.broadcast %25 : i32 to vector<1x128xi32>
      %38 = arith.addi %27, %37 : vector<1x128xi32>
      %39 = arith.select %36, %38, %27 : vector<1x128xi1>, vector<1x128xi32>
      %c-1_i32 = arith.constant -1 : i32
      %40 = vector.broadcast %c-1_i32 : i32 to vector<1x128xi32>
      %41 = arith.addi %39, %40 : vector<1x128xi32>
      %c0_i32_21 = arith.constant 0 : i32
      %42 = vector.broadcast %c0_i32_21 : i32 to vector<1x128xi32>
      %43 = arith.cmpi sge, %41, %42 : vector<1x128xi32>
      %c-1_i32_22 = arith.constant -1 : i32
      %44 = vector.broadcast %c-1_i32_22 : i32 to vector<1x128xi32>
      %45 = arith.addi %39, %44 : vector<1x128xi32>
      %c16_i32_23 = arith.constant 16 : i32
      %46 = vector.broadcast %c16_i32_23 : i32 to vector<1x128xi32>
      %47 = arith.cmpi slt, %45, %46 : vector<1x128xi32>
      %48 = arith.andi %43, %47 : vector<1x128xi1>
      %49 = arith.extui %48 : vector<1x128xi1> to vector<1x128xi32>
      %50 = arith.sitofp %49 : vector<1x128xi32> to vector<1x128xf32>
      %c0_i32_24 = arith.constant 0 : i32
      %51 = vector.broadcast %c0_i32_24 : i32 to vector<1x128xi32>
      %52 = arith.addi %39, %51 : vector<1x128xi32>
      %c0_i32_25 = arith.constant 0 : i32
      %53 = vector.broadcast %c0_i32_25 : i32 to vector<1x128xi32>
      %54 = arith.cmpi sge, %52, %53 : vector<1x128xi32>
      %c0_i32_26 = arith.constant 0 : i32
      %55 = vector.broadcast %c0_i32_26 : i32 to vector<1x128xi32>
      %56 = arith.addi %39, %55 : vector<1x128xi32>
      %c16_i32_27 = arith.constant 16 : i32
      %57 = vector.broadcast %c16_i32_27 : i32 to vector<1x128xi32>
      %58 = arith.cmpi slt, %56, %57 : vector<1x128xi32>
      %59 = arith.andi %54, %58 : vector<1x128xi1>
      %60 = arith.extui %59 : vector<1x128xi1> to vector<1x128xi32>
      %61 = arith.sitofp %60 : vector<1x128xi32> to vector<1x128xf32>
      %c1_i32_28 = arith.constant 1 : i32
      %62 = vector.broadcast %c1_i32_28 : i32 to vector<1x128xi32>
      %63 = arith.addi %39, %62 : vector<1x128xi32>
      %c0_i32_29 = arith.constant 0 : i32
      %64 = vector.broadcast %c0_i32_29 : i32 to vector<1x128xi32>
      %65 = arith.cmpi sge, %63, %64 : vector<1x128xi32>
      %c1_i32_30 = arith.constant 1 : i32
      %66 = vector.broadcast %c1_i32_30 : i32 to vector<1x128xi32>
      %67 = arith.addi %39, %66 : vector<1x128xi32>
      %c16_i32_31 = arith.constant 16 : i32
      %68 = vector.broadcast %c16_i32_31 : i32 to vector<1x128xi32>
      %69 = arith.cmpi slt, %67, %68 : vector<1x128xi32>
      %70 = arith.andi %65, %69 : vector<1x128xi1>
      %71 = arith.extui %70 : vector<1x128xi1> to vector<1x128xi32>
      %72 = arith.sitofp %71 : vector<1x128xi32> to vector<1x128xf32>
      %cst = arith.constant 0.000000e+00 : f32
      %73 = vector.broadcast %cst : f32 to vector<4x128xf32>
      %cst_32 = arith.constant 0.000000e+00 : f32
      %74 = vector.broadcast %cst_32 : f32 to vector<4x128xf32>
      %cst_33 = arith.constant 0.000000e+00 : f32
      %75 = vector.broadcast %cst_33 : f32 to vector<4x128xf32>
      %cst_34 = arith.constant 0.000000e+00 : f32
      %76 = vector.broadcast %cst_34 : f32 to vector<4x128xf32>
      %c0_35 = arith.constant 0 : index
      %c0_36 = arith.constant 0 : index
      %c0_37 = arith.constant 0 : index
      %77 = vector.load %arg5[%c0_35, %c0_36, %c0_37] : memref<2x6x162xf32, #tpu.memory_space<vmem>>, vector<1x6x128xf32>
      %78 = vector.shape_cast %77 : vector<1x6x128xf32> to vector<6x128xf32>
      %79 = vector.broadcast %50 : vector<1x128xf32> to vector<6x128xf32>
      %80 = arith.mulf %78, %79 : vector<6x128xf32>
      %c0_38 = arith.constant 0 : index
      %81 = memref.load %arg2[%c0_38] : memref<54xf32, #tpu.memory_space<smem>>
      %82 = vector.extract_strided_slice %80 {offsets = [0, 0], sizes = [4, 128], strides = [1, 1]} : vector<6x128xf32> to vector<4x128xf32>
      %83 = vector.broadcast %81 : f32 to vector<4x128xf32>
      %84 = arith.mulf %83, %82 : vector<4x128xf32>
      %85 = arith.addf %73, %84 : vector<4x128xf32>
      %c9 = arith.constant 9 : index
      %86 = memref.load %arg2[%c9] : memref<54xf32, #tpu.memory_space<smem>>
      %87 = vector.extract_strided_slice %80 {offsets = [1, 0], sizes = [4, 128], strides = [1, 1]} : vector<6x128xf32> to vector<4x128xf32>
      %88 = vector.broadcast %86 : f32 to vector<4x128xf32>
      %89 = arith.mulf %88, %87 : vector<4x128xf32>
      %90 = arith.addf %74, %89 : vector<4x128xf32>
      %c18 = arith.constant 18 : index
      %91 = memref.load %arg2[%c18] : memref<54xf32, #tpu.memory_space<smem>>
      %92 = vector.extract_strided_slice %80 {offsets = [2, 0], sizes = [4, 128], strides = [1, 1]} : vector<6x128xf32> to vector<4x128xf32>
      %93 = vector.broadcast %91 : f32 to vector<4x128xf32>
      %94 = arith.mulf %93, %92 : vector<4x128xf32>
      %95 = arith.addf %75, %94 : vector<4x128xf32>
      %c0_39 = arith.constant 0 : index
      %c0_40 = arith.constant 0 : index
      %c1_41 = arith.constant 1 : index
      %96 = vector.load %arg5[%c0_39, %c0_40, %c1_41] : memref<2x6x162xf32, #tpu.memory_space<vmem>>, vector<1x6x128xf32>
      %97 = vector.shape_cast %96 : vector<1x6x128xf32> to vector<6x128xf32>
      %98 = vector.broadcast %61 : vector<1x128xf32> to vector<6x128xf32>
      %99 = arith.mulf %97, %98 : vector<6x128xf32>
      %c1_42 = arith.constant 1 : index
      %100 = memref.load %arg2[%c1_42] : memref<54xf32, #tpu.memory_space<smem>>
      %101 = vector.extract_strided_slice %99 {offsets = [0, 0], sizes = [4, 128], strides = [1, 1]} : vector<6x128xf32> to vector<4x128xf32>
      %102 = vector.broadcast %100 : f32 to vector<4x128xf32>
      %103 = arith.mulf %102, %101 : vector<4x128xf32>
      %104 = arith.addf %76, %103 : vector<4x128xf32>
      %c10 = arith.constant 10 : index
      %105 = memref.load %arg2[%c10] : memref<54xf32, #tpu.memory_space<smem>>
      %106 = vector.extract_strided_slice %99 {offsets = [1, 0], sizes = [4, 128], strides = [1, 1]} : vector<6x128xf32> to vector<4x128xf32>
      %107 = vector.broadcast %105 : f32 to vector<4x128xf32>
      %108 = arith.mulf %107, %106 : vector<4x128xf32>
      %109 = arith.addf %85, %108 : vector<4x128xf32>
      %c19 = arith.constant 19 : index
      %110 = memref.load %arg2[%c19] : memref<54xf32, #tpu.memory_space<smem>>
      %111 = vector.extract_strided_slice %99 {offsets = [2, 0], sizes = [4, 128], strides = [1, 1]} : vector<6x128xf32> to vector<4x128xf32>
      %112 = vector.broadcast %110 : f32 to vector<4x128xf32>
      %113 = arith.mulf %112, %111 : vector<4x128xf32>
      %114 = arith.addf %90, %113 : vector<4x128xf32>
      %c0_43 = arith.constant 0 : index
      %c0_44 = arith.constant 0 : index
      %c2_45 = arith.constant 2 : index
      %115 = vector.load %arg5[%c0_43, %c0_44, %c2_45] : memref<2x6x162xf32, #tpu.memory_space<vmem>>, vector<1x6x128xf32>
      %116 = vector.shape_cast %115 : vector<1x6x128xf32> to vector<6x128xf32>
      %117 = vector.broadcast %72 : vector<1x128xf32> to vector<6x128xf32>
      %118 = arith.mulf %116, %117 : vector<6x128xf32>
      %c2_46 = arith.constant 2 : index
      %119 = memref.load %arg2[%c2_46] : memref<54xf32, #tpu.memory_space<smem>>
      %120 = vector.extract_strided_slice %118 {offsets = [0, 0], sizes = [4, 128], strides = [1, 1]} : vector<6x128xf32> to vector<4x128xf32>
      %121 = vector.broadcast %119 : f32 to vector<4x128xf32>
      %122 = arith.mulf %121, %120 : vector<4x128xf32>
      %123 = arith.addf %95, %122 : vector<4x128xf32>
      %c11 = arith.constant 11 : index
      %124 = memref.load %arg2[%c11] : memref<54xf32, #tpu.memory_space<smem>>
      %125 = vector.extract_strided_slice %118 {offsets = [1, 0], sizes = [4, 128], strides = [1, 1]} : vector<6x128xf32> to vector<4x128xf32>
      %126 = vector.broadcast %124 : f32 to vector<4x128xf32>
      %127 = arith.mulf %126, %125 : vector<4x128xf32>
      %128 = arith.addf %104, %127 : vector<4x128xf32>
      %c20 = arith.constant 20 : index
      %129 = memref.load %arg2[%c20] : memref<54xf32, #tpu.memory_space<smem>>
      %130 = vector.extract_strided_slice %118 {offsets = [2, 0], sizes = [4, 128], strides = [1, 1]} : vector<6x128xf32> to vector<4x128xf32>
      %131 = vector.broadcast %129 : f32 to vector<4x128xf32>
      %132 = arith.mulf %131, %130 : vector<4x128xf32>
      %133 = arith.addf %109, %132 : vector<4x128xf32>
      %c0_47 = arith.constant 0 : index
      %c0_48 = arith.constant 0 : index
      %c16 = arith.constant 16 : index
      %134 = vector.load %arg5[%c0_47, %c0_48, %c16] : memref<2x6x162xf32, #tpu.memory_space<vmem>>, vector<1x6x128xf32>
      %135 = vector.shape_cast %134 : vector<1x6x128xf32> to vector<6x128xf32>
      %136 = vector.broadcast %50 : vector<1x128xf32> to vector<6x128xf32>
      %137 = arith.mulf %135, %136 : vector<6x128xf32>
      %c3_49 = arith.constant 3 : index
      %138 = memref.load %arg2[%c3_49] : memref<54xf32, #tpu.memory_space<smem>>
      %139 = vector.extract_strided_slice %137 {offsets = [0, 0], sizes = [4, 128], strides = [1, 1]} : vector<6x128xf32> to vector<4x128xf32>
      %140 = vector.broadcast %138 : f32 to vector<4x128xf32>
      %141 = arith.mulf %140, %139 : vector<4x128xf32>
      %142 = arith.addf %114, %141 : vector<4x128xf32>
      %c12 = arith.constant 12 : index
      %143 = memref.load %arg2[%c12] : memref<54xf32, #tpu.memory_space<smem>>
      %144 = vector.extract_strided_slice %137 {offsets = [1, 0], sizes = [4, 128], strides = [1, 1]} : vector<6x128xf32> to vector<4x128xf32>
      %145 = vector.broadcast %143 : f32 to vector<4x128xf32>
      %146 = arith.mulf %145, %144 : vector<4x128xf32>
      %147 = arith.addf %123, %146 : vector<4x128xf32>
      %c21 = arith.constant 21 : index
      %148 = memref.load %arg2[%c21] : memref<54xf32, #tpu.memory_space<smem>>
      %149 = vector.extract_strided_slice %137 {offsets = [2, 0], sizes = [4, 128], strides = [1, 1]} : vector<6x128xf32> to vector<4x128xf32>
      %150 = vector.broadcast %148 : f32 to vector<4x128xf32>
      %151 = arith.mulf %150, %149 : vector<4x128xf32>
      %152 = arith.addf %128, %151 : vector<4x128xf32>
      %c0_50 = arith.constant 0 : index
      %c0_51 = arith.constant 0 : index
      %c17 = arith.constant 17 : index
      %153 = vector.load %arg5[%c0_50, %c0_51, %c17] : memref<2x6x162xf32, #tpu.memory_space<vmem>>, vector<1x6x128xf32>
      %154 = vector.shape_cast %153 : vector<1x6x128xf32> to vector<6x128xf32>
      %155 = vector.broadcast %61 : vector<1x128xf32> to vector<6x128xf32>
      %156 = arith.mulf %154, %155 : vector<6x128xf32>
      %c4 = arith.constant 4 : index
      %157 = memref.load %arg2[%c4] : memref<54xf32, #tpu.memory_space<smem>>
      %158 = vector.extract_strided_slice %156 {offsets = [0, 0], sizes = [4, 128], strides = [1, 1]} : vector<6x128xf32> to vector<4x128xf32>
      %159 = vector.broadcast %157 : f32 to vector<4x128xf32>
      %160 = arith.mulf %159, %158 : vector<4x128xf32>
      %161 = arith.addf %133, %160 : vector<4x128xf32>
      %c13 = arith.constant 13 : index
      %162 = memref.load %arg2[%c13] : memref<54xf32, #tpu.memory_space<smem>>
      %163 = vector.extract_strided_slice %156 {offsets = [1, 0], sizes = [4, 128], strides = [1, 1]} : vector<6x128xf32> to vector<4x128xf32>
      %164 = vector.broadcast %162 : f32 to vector<4x128xf32>
      %165 = arith.mulf %164, %163 : vector<4x128xf32>
      %166 = arith.addf %142, %165 : vector<4x128xf32>
      %c22 = arith.constant 22 : index
      %167 = memref.load %arg2[%c22] : memref<54xf32, #tpu.memory_space<smem>>
      %168 = vector.extract_strided_slice %156 {offsets = [2, 0], sizes = [4, 128], strides = [1, 1]} : vector<6x128xf32> to vector<4x128xf32>
      %169 = vector.broadcast %167 : f32 to vector<4x128xf32>
      %170 = arith.mulf %169, %168 : vector<4x128xf32>
      %171 = arith.addf %147, %170 : vector<4x128xf32>
      %c0_52 = arith.constant 0 : index
      %c0_53 = arith.constant 0 : index
      %c18_54 = arith.constant 18 : index
      %172 = vector.load %arg5[%c0_52, %c0_53, %c18_54] : memref<2x6x162xf32, #tpu.memory_space<vmem>>, vector<1x6x128xf32>
      %173 = vector.shape_cast %172 : vector<1x6x128xf32> to vector<6x128xf32>
      %174 = vector.broadcast %72 : vector<1x128xf32> to vector<6x128xf32>
      %175 = arith.mulf %173, %174 : vector<6x128xf32>
      %c5 = arith.constant 5 : index
      %176 = memref.load %arg2[%c5] : memref<54xf32, #tpu.memory_space<smem>>
      %177 = vector.extract_strided_slice %175 {offsets = [0, 0], sizes = [4, 128], strides = [1, 1]} : vector<6x128xf32> to vector<4x128xf32>
      %178 = vector.broadcast %176 : f32 to vector<4x128xf32>
      %179 = arith.mulf %178, %177 : vector<4x128xf32>
      %180 = arith.addf %152, %179 : vector<4x128xf32>
      %c14 = arith.constant 14 : index
      %181 = memref.load %arg2[%c14] : memref<54xf32, #tpu.memory_space<smem>>
      %182 = vector.extract_strided_slice %175 {offsets = [1, 0], sizes = [4, 128], strides = [1, 1]} : vector<6x128xf32> to vector<4x128xf32>
      %183 = vector.broadcast %181 : f32 to vector<4x128xf32>
      %184 = arith.mulf %183, %182 : vector<4x128xf32>
      %185 = arith.addf %161, %184 : vector<4x128xf32>
      %c23 = arith.constant 23 : index
      %186 = memref.load %arg2[%c23] : memref<54xf32, #tpu.memory_space<smem>>
      %187 = vector.extract_strided_slice %175 {offsets = [2, 0], sizes = [4, 128], strides = [1, 1]} : vector<6x128xf32> to vector<4x128xf32>
      %188 = vector.broadcast %186 : f32 to vector<4x128xf32>
      %189 = arith.mulf %188, %187 : vector<4x128xf32>
      %190 = arith.addf %166, %189 : vector<4x128xf32>
      %c0_55 = arith.constant 0 : index
      %c0_56 = arith.constant 0 : index
      %c32 = arith.constant 32 : index
      %191 = vector.load %arg5[%c0_55, %c0_56, %c32] : memref<2x6x162xf32, #tpu.memory_space<vmem>>, vector<1x6x128xf32>
      %192 = vector.shape_cast %191 : vector<1x6x128xf32> to vector<6x128xf32>
      %193 = vector.broadcast %50 : vector<1x128xf32> to vector<6x128xf32>
      %194 = arith.mulf %192, %193 : vector<6x128xf32>
      %c6 = arith.constant 6 : index
      %195 = memref.load %arg2[%c6] : memref<54xf32, #tpu.memory_space<smem>>
      %196 = vector.extract_strided_slice %194 {offsets = [0, 0], sizes = [4, 128], strides = [1, 1]} : vector<6x128xf32> to vector<4x128xf32>
      %197 = vector.broadcast %195 : f32 to vector<4x128xf32>
      %198 = arith.mulf %197, %196 : vector<4x128xf32>
      %199 = arith.addf %171, %198 : vector<4x128xf32>
      %c15 = arith.constant 15 : index
      %200 = memref.load %arg2[%c15] : memref<54xf32, #tpu.memory_space<smem>>
      %201 = vector.extract_strided_slice %194 {offsets = [1, 0], sizes = [4, 128], strides = [1, 1]} : vector<6x128xf32> to vector<4x128xf32>
      %202 = vector.broadcast %200 : f32 to vector<4x128xf32>
      %203 = arith.mulf %202, %201 : vector<4x128xf32>
      %204 = arith.addf %180, %203 : vector<4x128xf32>
      %c24 = arith.constant 24 : index
      %205 = memref.load %arg2[%c24] : memref<54xf32, #tpu.memory_space<smem>>
      %206 = vector.extract_strided_slice %194 {offsets = [2, 0], sizes = [4, 128], strides = [1, 1]} : vector<6x128xf32> to vector<4x128xf32>
      %207 = vector.broadcast %205 : f32 to vector<4x128xf32>
      %208 = arith.mulf %207, %206 : vector<4x128xf32>
      %209 = arith.addf %185, %208 : vector<4x128xf32>
      %c0_57 = arith.constant 0 : index
      %c0_58 = arith.constant 0 : index
      %c33 = arith.constant 33 : index
      %210 = vector.load %arg5[%c0_57, %c0_58, %c33] : memref<2x6x162xf32, #tpu.memory_space<vmem>>, vector<1x6x128xf32>
      %211 = vector.shape_cast %210 : vector<1x6x128xf32> to vector<6x128xf32>
      %212 = vector.broadcast %61 : vector<1x128xf32> to vector<6x128xf32>
      %213 = arith.mulf %211, %212 : vector<6x128xf32>
      %c7 = arith.constant 7 : index
      %214 = memref.load %arg2[%c7] : memref<54xf32, #tpu.memory_space<smem>>
      %215 = vector.extract_strided_slice %213 {offsets = [0, 0], sizes = [4, 128], strides = [1, 1]} : vector<6x128xf32> to vector<4x128xf32>
      %216 = vector.broadcast %214 : f32 to vector<4x128xf32>
      %217 = arith.mulf %216, %215 : vector<4x128xf32>
      %218 = arith.addf %190, %217 : vector<4x128xf32>
      %c16_59 = arith.constant 16 : index
      %219 = memref.load %arg2[%c16_59] : memref<54xf32, #tpu.memory_space<smem>>
      %220 = vector.extract_strided_slice %213 {offsets = [1, 0], sizes = [4, 128], strides = [1, 1]} : vector<6x128xf32> to vector<4x128xf32>
      %221 = vector.broadcast %219 : f32 to vector<4x128xf32>
      %222 = arith.mulf %221, %220 : vector<4x128xf32>
      %223 = arith.addf %199, %222 : vector<4x128xf32>
      %c25 = arith.constant 25 : index
      %224 = memref.load %arg2[%c25] : memref<54xf32, #tpu.memory_space<smem>>
      %225 = vector.extract_strided_slice %213 {offsets = [2, 0], sizes = [4, 128], strides = [1, 1]} : vector<6x128xf32> to vector<4x128xf32>
      %226 = vector.broadcast %224 : f32 to vector<4x128xf32>
      %227 = arith.mulf %226, %225 : vector<4x128xf32>
      %228 = arith.addf %204, %227 : vector<4x128xf32>
      %c0_60 = arith.constant 0 : index
      %c0_61 = arith.constant 0 : index
      %c34 = arith.constant 34 : index
      %229 = vector.load %arg5[%c0_60, %c0_61, %c34] : memref<2x6x162xf32, #tpu.memory_space<vmem>>, vector<1x6x128xf32>
      %230 = vector.shape_cast %229 : vector<1x6x128xf32> to vector<6x128xf32>
      %231 = vector.broadcast %72 : vector<1x128xf32> to vector<6x128xf32>
      %232 = arith.mulf %230, %231 : vector<6x128xf32>
      %c8 = arith.constant 8 : index
      %233 = memref.load %arg2[%c8] : memref<54xf32, #tpu.memory_space<smem>>
      %234 = vector.extract_strided_slice %232 {offsets = [0, 0], sizes = [4, 128], strides = [1, 1]} : vector<6x128xf32> to vector<4x128xf32>
      %235 = vector.broadcast %233 : f32 to vector<4x128xf32>
      %236 = arith.mulf %235, %234 : vector<4x128xf32>
      %237 = arith.addf %209, %236 : vector<4x128xf32>
      %c17_62 = arith.constant 17 : index
      %238 = memref.load %arg2[%c17_62] : memref<54xf32, #tpu.memory_space<smem>>
      %239 = vector.extract_strided_slice %232 {offsets = [1, 0], sizes = [4, 128], strides = [1, 1]} : vector<6x128xf32> to vector<4x128xf32>
      %240 = vector.broadcast %238 : f32 to vector<4x128xf32>
      %241 = arith.mulf %240, %239 : vector<4x128xf32>
      %242 = arith.addf %218, %241 : vector<4x128xf32>
      %c26 = arith.constant 26 : index
      %243 = memref.load %arg2[%c26] : memref<54xf32, #tpu.memory_space<smem>>
      %244 = vector.extract_strided_slice %232 {offsets = [2, 0], sizes = [4, 128], strides = [1, 1]} : vector<6x128xf32> to vector<4x128xf32>
      %245 = vector.broadcast %243 : f32 to vector<4x128xf32>
      %246 = arith.mulf %245, %244 : vector<4x128xf32>
      %247 = arith.addf %223, %246 : vector<4x128xf32>
      %c1_63 = arith.constant 1 : index
      %c0_64 = arith.constant 0 : index
      %c0_65 = arith.constant 0 : index
      %248 = vector.load %arg5[%c1_63, %c0_64, %c0_65] : memref<2x6x162xf32, #tpu.memory_space<vmem>>, vector<1x6x128xf32>
      %249 = vector.shape_cast %248 : vector<1x6x128xf32> to vector<6x128xf32>
      %250 = vector.broadcast %50 : vector<1x128xf32> to vector<6x128xf32>
      %251 = arith.mulf %249, %250 : vector<6x128xf32>
      %c27 = arith.constant 27 : index
      %252 = memref.load %arg2[%c27] : memref<54xf32, #tpu.memory_space<smem>>
      %253 = vector.extract_strided_slice %251 {offsets = [0, 0], sizes = [4, 128], strides = [1, 1]} : vector<6x128xf32> to vector<4x128xf32>
      %254 = vector.broadcast %252 : f32 to vector<4x128xf32>
      %255 = arith.mulf %254, %253 : vector<4x128xf32>
      %256 = arith.addf %228, %255 : vector<4x128xf32>
      %c36 = arith.constant 36 : index
      %257 = memref.load %arg2[%c36] : memref<54xf32, #tpu.memory_space<smem>>
      %258 = vector.extract_strided_slice %251 {offsets = [1, 0], sizes = [4, 128], strides = [1, 1]} : vector<6x128xf32> to vector<4x128xf32>
      %259 = vector.broadcast %257 : f32 to vector<4x128xf32>
      %260 = arith.mulf %259, %258 : vector<4x128xf32>
      %261 = arith.addf %237, %260 : vector<4x128xf32>
      %c45 = arith.constant 45 : index
      %262 = memref.load %arg2[%c45] : memref<54xf32, #tpu.memory_space<smem>>
      %263 = vector.extract_strided_slice %251 {offsets = [2, 0], sizes = [4, 128], strides = [1, 1]} : vector<6x128xf32> to vector<4x128xf32>
      %264 = vector.broadcast %262 : f32 to vector<4x128xf32>
      %265 = arith.mulf %264, %263 : vector<4x128xf32>
      %266 = arith.addf %242, %265 : vector<4x128xf32>
      %c1_66 = arith.constant 1 : index
      %c0_67 = arith.constant 0 : index
      %c1_68 = arith.constant 1 : index
      %267 = vector.load %arg5[%c1_66, %c0_67, %c1_68] : memref<2x6x162xf32, #tpu.memory_space<vmem>>, vector<1x6x128xf32>
      %268 = vector.shape_cast %267 : vector<1x6x128xf32> to vector<6x128xf32>
      %269 = vector.broadcast %61 : vector<1x128xf32> to vector<6x128xf32>
      %270 = arith.mulf %268, %269 : vector<6x128xf32>
      %c28 = arith.constant 28 : index
      %271 = memref.load %arg2[%c28] : memref<54xf32, #tpu.memory_space<smem>>
      %272 = vector.extract_strided_slice %270 {offsets = [0, 0], sizes = [4, 128], strides = [1, 1]} : vector<6x128xf32> to vector<4x128xf32>
      %273 = vector.broadcast %271 : f32 to vector<4x128xf32>
      %274 = arith.mulf %273, %272 : vector<4x128xf32>
      %275 = arith.addf %247, %274 : vector<4x128xf32>
      %c37 = arith.constant 37 : index
      %276 = memref.load %arg2[%c37] : memref<54xf32, #tpu.memory_space<smem>>
      %277 = vector.extract_strided_slice %270 {offsets = [1, 0], sizes = [4, 128], strides = [1, 1]} : vector<6x128xf32> to vector<4x128xf32>
      %278 = vector.broadcast %276 : f32 to vector<4x128xf32>
      %279 = arith.mulf %278, %277 : vector<4x128xf32>
      %280 = arith.addf %256, %279 : vector<4x128xf32>
      %c46 = arith.constant 46 : index
      %281 = memref.load %arg2[%c46] : memref<54xf32, #tpu.memory_space<smem>>
      %282 = vector.extract_strided_slice %270 {offsets = [2, 0], sizes = [4, 128], strides = [1, 1]} : vector<6x128xf32> to vector<4x128xf32>
      %283 = vector.broadcast %281 : f32 to vector<4x128xf32>
      %284 = arith.mulf %283, %282 : vector<4x128xf32>
      %285 = arith.addf %261, %284 : vector<4x128xf32>
      %c1_69 = arith.constant 1 : index
      %c0_70 = arith.constant 0 : index
      %c2_71 = arith.constant 2 : index
      %286 = vector.load %arg5[%c1_69, %c0_70, %c2_71] : memref<2x6x162xf32, #tpu.memory_space<vmem>>, vector<1x6x128xf32>
      %287 = vector.shape_cast %286 : vector<1x6x128xf32> to vector<6x128xf32>
      %288 = vector.broadcast %72 : vector<1x128xf32> to vector<6x128xf32>
      %289 = arith.mulf %287, %288 : vector<6x128xf32>
      %c29 = arith.constant 29 : index
      %290 = memref.load %arg2[%c29] : memref<54xf32, #tpu.memory_space<smem>>
      %291 = vector.extract_strided_slice %289 {offsets = [0, 0], sizes = [4, 128], strides = [1, 1]} : vector<6x128xf32> to vector<4x128xf32>
      %292 = vector.broadcast %290 : f32 to vector<4x128xf32>
      %293 = arith.mulf %292, %291 : vector<4x128xf32>
      %294 = arith.addf %266, %293 : vector<4x128xf32>
      %c38 = arith.constant 38 : index
      %295 = memref.load %arg2[%c38] : memref<54xf32, #tpu.memory_space<smem>>
      %296 = vector.extract_strided_slice %289 {offsets = [1, 0], sizes = [4, 128], strides = [1, 1]} : vector<6x128xf32> to vector<4x128xf32>
      %297 = vector.broadcast %295 : f32 to vector<4x128xf32>
      %298 = arith.mulf %297, %296 : vector<4x128xf32>
      %299 = arith.addf %275, %298 : vector<4x128xf32>
      %c47 = arith.constant 47 : index
      %300 = memref.load %arg2[%c47] : memref<54xf32, #tpu.memory_space<smem>>
      %301 = vector.extract_strided_slice %289 {offsets = [2, 0], sizes = [4, 128], strides = [1, 1]} : vector<6x128xf32> to vector<4x128xf32>
      %302 = vector.broadcast %300 : f32 to vector<4x128xf32>
      %303 = arith.mulf %302, %301 : vector<4x128xf32>
      %304 = arith.addf %280, %303 : vector<4x128xf32>
      %c1_72 = arith.constant 1 : index
      %c0_73 = arith.constant 0 : index
      %c16_74 = arith.constant 16 : index
      %305 = vector.load %arg5[%c1_72, %c0_73, %c16_74] : memref<2x6x162xf32, #tpu.memory_space<vmem>>, vector<1x6x128xf32>
      %306 = vector.shape_cast %305 : vector<1x6x128xf32> to vector<6x128xf32>
      %307 = vector.broadcast %50 : vector<1x128xf32> to vector<6x128xf32>
      %308 = arith.mulf %306, %307 : vector<6x128xf32>
      %c30 = arith.constant 30 : index
      %309 = memref.load %arg2[%c30] : memref<54xf32, #tpu.memory_space<smem>>
      %310 = vector.extract_strided_slice %308 {offsets = [0, 0], sizes = [4, 128], strides = [1, 1]} : vector<6x128xf32> to vector<4x128xf32>
      %311 = vector.broadcast %309 : f32 to vector<4x128xf32>
      %312 = arith.mulf %311, %310 : vector<4x128xf32>
      %313 = arith.addf %285, %312 : vector<4x128xf32>
      %c39 = arith.constant 39 : index
      %314 = memref.load %arg2[%c39] : memref<54xf32, #tpu.memory_space<smem>>
      %315 = vector.extract_strided_slice %308 {offsets = [1, 0], sizes = [4, 128], strides = [1, 1]} : vector<6x128xf32> to vector<4x128xf32>
      %316 = vector.broadcast %314 : f32 to vector<4x128xf32>
      %317 = arith.mulf %316, %315 : vector<4x128xf32>
      %318 = arith.addf %294, %317 : vector<4x128xf32>
      %c48 = arith.constant 48 : index
      %319 = memref.load %arg2[%c48] : memref<54xf32, #tpu.memory_space<smem>>
      %320 = vector.extract_strided_slice %308 {offsets = [2, 0], sizes = [4, 128], strides = [1, 1]} : vector<6x128xf32> to vector<4x128xf32>
      %321 = vector.broadcast %319 : f32 to vector<4x128xf32>
      %322 = arith.mulf %321, %320 : vector<4x128xf32>
      %323 = arith.addf %299, %322 : vector<4x128xf32>
      %c1_75 = arith.constant 1 : index
      %c0_76 = arith.constant 0 : index
      %c17_77 = arith.constant 17 : index
      %324 = vector.load %arg5[%c1_75, %c0_76, %c17_77] : memref<2x6x162xf32, #tpu.memory_space<vmem>>, vector<1x6x128xf32>
      %325 = vector.shape_cast %324 : vector<1x6x128xf32> to vector<6x128xf32>
      %326 = vector.broadcast %61 : vector<1x128xf32> to vector<6x128xf32>
      %327 = arith.mulf %325, %326 : vector<6x128xf32>
      %c31 = arith.constant 31 : index
      %328 = memref.load %arg2[%c31] : memref<54xf32, #tpu.memory_space<smem>>
      %329 = vector.extract_strided_slice %327 {offsets = [0, 0], sizes = [4, 128], strides = [1, 1]} : vector<6x128xf32> to vector<4x128xf32>
      %330 = vector.broadcast %328 : f32 to vector<4x128xf32>
      %331 = arith.mulf %330, %329 : vector<4x128xf32>
      %332 = arith.addf %304, %331 : vector<4x128xf32>
      %c40 = arith.constant 40 : index
      %333 = memref.load %arg2[%c40] : memref<54xf32, #tpu.memory_space<smem>>
      %334 = vector.extract_strided_slice %327 {offsets = [1, 0], sizes = [4, 128], strides = [1, 1]} : vector<6x128xf32> to vector<4x128xf32>
      %335 = vector.broadcast %333 : f32 to vector<4x128xf32>
      %336 = arith.mulf %335, %334 : vector<4x128xf32>
      %337 = arith.addf %313, %336 : vector<4x128xf32>
      %c49 = arith.constant 49 : index
      %338 = memref.load %arg2[%c49] : memref<54xf32, #tpu.memory_space<smem>>
      %339 = vector.extract_strided_slice %327 {offsets = [2, 0], sizes = [4, 128], strides = [1, 1]} : vector<6x128xf32> to vector<4x128xf32>
      %340 = vector.broadcast %338 : f32 to vector<4x128xf32>
      %341 = arith.mulf %340, %339 : vector<4x128xf32>
      %342 = arith.addf %318, %341 : vector<4x128xf32>
      %c1_78 = arith.constant 1 : index
      %c0_79 = arith.constant 0 : index
      %c18_80 = arith.constant 18 : index
      %343 = vector.load %arg5[%c1_78, %c0_79, %c18_80] : memref<2x6x162xf32, #tpu.memory_space<vmem>>, vector<1x6x128xf32>
      %344 = vector.shape_cast %343 : vector<1x6x128xf32> to vector<6x128xf32>
      %345 = vector.broadcast %72 : vector<1x128xf32> to vector<6x128xf32>
      %346 = arith.mulf %344, %345 : vector<6x128xf32>
      %c32_81 = arith.constant 32 : index
      %347 = memref.load %arg2[%c32_81] : memref<54xf32, #tpu.memory_space<smem>>
      %348 = vector.extract_strided_slice %346 {offsets = [0, 0], sizes = [4, 128], strides = [1, 1]} : vector<6x128xf32> to vector<4x128xf32>
      %349 = vector.broadcast %347 : f32 to vector<4x128xf32>
      %350 = arith.mulf %349, %348 : vector<4x128xf32>
      %351 = arith.addf %323, %350 : vector<4x128xf32>
      %c41 = arith.constant 41 : index
      %352 = memref.load %arg2[%c41] : memref<54xf32, #tpu.memory_space<smem>>
      %353 = vector.extract_strided_slice %346 {offsets = [1, 0], sizes = [4, 128], strides = [1, 1]} : vector<6x128xf32> to vector<4x128xf32>
      %354 = vector.broadcast %352 : f32 to vector<4x128xf32>
      %355 = arith.mulf %354, %353 : vector<4x128xf32>
      %356 = arith.addf %332, %355 : vector<4x128xf32>
      %c50 = arith.constant 50 : index
      %357 = memref.load %arg2[%c50] : memref<54xf32, #tpu.memory_space<smem>>
      %358 = vector.extract_strided_slice %346 {offsets = [2, 0], sizes = [4, 128], strides = [1, 1]} : vector<6x128xf32> to vector<4x128xf32>
      %359 = vector.broadcast %357 : f32 to vector<4x128xf32>
      %360 = arith.mulf %359, %358 : vector<4x128xf32>
      %361 = arith.addf %337, %360 : vector<4x128xf32>
      %c1_82 = arith.constant 1 : index
      %c0_83 = arith.constant 0 : index
      %c32_84 = arith.constant 32 : index
      %362 = vector.load %arg5[%c1_82, %c0_83, %c32_84] : memref<2x6x162xf32, #tpu.memory_space<vmem>>, vector<1x6x128xf32>
      %363 = vector.shape_cast %362 : vector<1x6x128xf32> to vector<6x128xf32>
      %364 = vector.broadcast %50 : vector<1x128xf32> to vector<6x128xf32>
      %365 = arith.mulf %363, %364 : vector<6x128xf32>
      %c33_85 = arith.constant 33 : index
      %366 = memref.load %arg2[%c33_85] : memref<54xf32, #tpu.memory_space<smem>>
      %367 = vector.extract_strided_slice %365 {offsets = [0, 0], sizes = [4, 128], strides = [1, 1]} : vector<6x128xf32> to vector<4x128xf32>
      %368 = vector.broadcast %366 : f32 to vector<4x128xf32>
      %369 = arith.mulf %368, %367 : vector<4x128xf32>
      %370 = arith.addf %342, %369 : vector<4x128xf32>
      %c42 = arith.constant 42 : index
      %371 = memref.load %arg2[%c42] : memref<54xf32, #tpu.memory_space<smem>>
      %372 = vector.extract_strided_slice %365 {offsets = [1, 0], sizes = [4, 128], strides = [1, 1]} : vector<6x128xf32> to vector<4x128xf32>
      %373 = vector.broadcast %371 : f32 to vector<4x128xf32>
      %374 = arith.mulf %373, %372 : vector<4x128xf32>
      %375 = arith.addf %351, %374 : vector<4x128xf32>
      %c51 = arith.constant 51 : index
      %376 = memref.load %arg2[%c51] : memref<54xf32, #tpu.memory_space<smem>>
      %377 = vector.extract_strided_slice %365 {offsets = [2, 0], sizes = [4, 128], strides = [1, 1]} : vector<6x128xf32> to vector<4x128xf32>
      %378 = vector.broadcast %376 : f32 to vector<4x128xf32>
      %379 = arith.mulf %378, %377 : vector<4x128xf32>
      %380 = arith.addf %356, %379 : vector<4x128xf32>
      %c1_86 = arith.constant 1 : index
      %c0_87 = arith.constant 0 : index
      %c33_88 = arith.constant 33 : index
      %381 = vector.load %arg5[%c1_86, %c0_87, %c33_88] : memref<2x6x162xf32, #tpu.memory_space<vmem>>, vector<1x6x128xf32>
      %382 = vector.shape_cast %381 : vector<1x6x128xf32> to vector<6x128xf32>
      %383 = vector.broadcast %61 : vector<1x128xf32> to vector<6x128xf32>
      %384 = arith.mulf %382, %383 : vector<6x128xf32>
      %c34_89 = arith.constant 34 : index
      %385 = memref.load %arg2[%c34_89] : memref<54xf32, #tpu.memory_space<smem>>
      %386 = vector.extract_strided_slice %384 {offsets = [0, 0], sizes = [4, 128], strides = [1, 1]} : vector<6x128xf32> to vector<4x128xf32>
      %387 = vector.broadcast %385 : f32 to vector<4x128xf32>
      %388 = arith.mulf %387, %386 : vector<4x128xf32>
      %389 = arith.addf %361, %388 : vector<4x128xf32>
      %c43 = arith.constant 43 : index
      %390 = memref.load %arg2[%c43] : memref<54xf32, #tpu.memory_space<smem>>
      %391 = vector.extract_strided_slice %384 {offsets = [1, 0], sizes = [4, 128], strides = [1, 1]} : vector<6x128xf32> to vector<4x128xf32>
      %392 = vector.broadcast %390 : f32 to vector<4x128xf32>
      %393 = arith.mulf %392, %391 : vector<4x128xf32>
      %394 = arith.addf %370, %393 : vector<4x128xf32>
      %c52 = arith.constant 52 : index
      %395 = memref.load %arg2[%c52] : memref<54xf32, #tpu.memory_space<smem>>
      %396 = vector.extract_strided_slice %384 {offsets = [2, 0], sizes = [4, 128], strides = [1, 1]} : vector<6x128xf32> to vector<4x128xf32>
      %397 = vector.broadcast %395 : f32 to vector<4x128xf32>
      %398 = arith.mulf %397, %396 : vector<4x128xf32>
      %399 = arith.addf %375, %398 : vector<4x128xf32>
      %c1_90 = arith.constant 1 : index
      %c0_91 = arith.constant 0 : index
      %c34_92 = arith.constant 34 : index
      %400 = vector.load %arg5[%c1_90, %c0_91, %c34_92] : memref<2x6x162xf32, #tpu.memory_space<vmem>>, vector<1x6x128xf32>
      %401 = vector.shape_cast %400 : vector<1x6x128xf32> to vector<6x128xf32>
      %402 = vector.broadcast %72 : vector<1x128xf32> to vector<6x128xf32>
      %403 = arith.mulf %401, %402 : vector<6x128xf32>
      %c35 = arith.constant 35 : index
      %404 = memref.load %arg2[%c35] : memref<54xf32, #tpu.memory_space<smem>>
      %405 = vector.extract_strided_slice %403 {offsets = [0, 0], sizes = [4, 128], strides = [1, 1]} : vector<6x128xf32> to vector<4x128xf32>
      %406 = vector.broadcast %404 : f32 to vector<4x128xf32>
      %407 = arith.mulf %406, %405 : vector<4x128xf32>
      %408 = arith.addf %380, %407 : vector<4x128xf32>
      %c44 = arith.constant 44 : index
      %409 = memref.load %arg2[%c44] : memref<54xf32, #tpu.memory_space<smem>>
      %410 = vector.extract_strided_slice %403 {offsets = [1, 0], sizes = [4, 128], strides = [1, 1]} : vector<6x128xf32> to vector<4x128xf32>
      %411 = vector.broadcast %409 : f32 to vector<4x128xf32>
      %412 = arith.mulf %411, %410 : vector<4x128xf32>
      %413 = arith.addf %389, %412 : vector<4x128xf32>
      %c53 = arith.constant 53 : index
      %414 = memref.load %arg2[%c53] : memref<54xf32, #tpu.memory_space<smem>>
      %415 = vector.extract_strided_slice %403 {offsets = [2, 0], sizes = [4, 128], strides = [1, 1]} : vector<6x128xf32> to vector<4x128xf32>
      %416 = vector.broadcast %414 : f32 to vector<4x128xf32>
      %417 = arith.mulf %416, %415 : vector<4x128xf32>
      %418 = arith.addf %394, %417 : vector<4x128xf32>
      %419 = arith.addf %413, %418 : vector<4x128xf32>
      %420 = arith.addf %399, %408 : vector<4x128xf32>
      %421 = arith.addf %419, %420 : vector<4x128xf32>
      %422 = arith.negf %421 : vector<4x128xf32>
      %423 = math.exp %422 : vector<4x128xf32>
      %cst_93 = arith.constant 1.000000e+00 : f32
      %424 = vector.broadcast %cst_93 : f32 to vector<4x128xf32>
      %425 = arith.addf %424, %423 : vector<4x128xf32>
      %426 = arith.divf %424, %425 : vector<4x128xf32>
      %c0_94 = arith.constant 0 : index
      %c0_95 = arith.constant 0 : index
      %c0_96 = arith.constant 0 : index
      %c0_97 = arith.constant 0 : index
      %427 = vector.load %arg4[%c0_94, %c0_95, %c0_96, %c0_97] : memref<1x1x4x128xf32, #tpu.memory_space<vmem>>, vector<1x1x4x128xf32>
      %428 = vector.shape_cast %427 : vector<1x1x4x128xf32> to vector<4x128xf32>
      %429 = vector.shape_cast %426 : vector<4x128xf32> to vector<1x1x4x128xf32>
      tpu.vector_store %arg4[%c0_94, %c0_95, %c0_96, %c0_97], %429 {strides = array<i32>} : memref<1x1x4x128xf32, #tpu.memory_space<vmem>>, vector<1x1x4x128xf32>,
    } else {
    }
    return
  }
  func.func @transform_0(%arg0: i32, %arg1: i32, %arg2: memref<54xf32, #tpu.memory_space<smem>>) -> (i32, i32, i32, i32) {
    %c0_i32 = arith.constant 0 : i32
    %c0_i32_0 = arith.constant 0 : i32
    %c0_i32_1 = arith.constant 0 : i32
    return %arg0, %arg1, %c0_i32, %c0_i32_0 : i32, i32, i32, i32
  }
  func.func @transform_1(%arg0: i32, %arg1: i32, %arg2: memref<54xf32, #tpu.memory_space<smem>>) -> (i32, i32, i32, i32) {
    %c0_i32 = arith.constant 0 : i32
    %c0_i32_0 = arith.constant 0 : i32
    %c0_i32_1 = arith.constant 0 : i32
    %c0_i32_2 = arith.constant 0 : i32
    return %arg0, %c0_i32, %c0_i32_0, %c0_i32_1 : i32, i32, i32, i32
  }
}

</mosaic_0001>

<llo_original>
// kernel: tpu_custom_call.1
$region0: #{tpu_custom_call.1}
  #allocation0 [shape = 'u32[]', space=smem, size = 0x4, offset = 0x4, fixed_abs, tag = 'smem constant byte address 0x4 - core index']
  #allocation1 [shape = 'u32[72,128]{1,0:T(1,128)}', space=vmem, size = 0x9000, scoped, tag = 'internal scratch']
  #allocation2 [shape = 'f32[2,6,162]{2,1,0:T(8,128)}', space=vmem, size = 0x4000, scoped, tag = 'scratch operand']
  #allocation3 [shape = 's32[1]{0}', space=sflag, size = 0x4, scoped, tag = 'scoped memory for tpu_custom_call.1']
  #allocation4 [shape = 'u8[512]{0}', space=smem, size = 0x200, scoped, tag = 'prefetched SMEM operand 0']
  %s0 = inlined_call_operand.hbm [shape: f32[54], index: 0, kind: input, shape index: {}]
  %s1 = inlined_call_operand.hbm [shape: f32[2,4,4,128], index: 1, kind: input, shape index: {}]
  %s2 = inlined_call_operand.hbm [shape: f32[2,1,4,128], index: 2, kind: output, shape index: {}]
  %s3 = sld [smem:[#allocation0]]
  $region53: #{tpu_custom_call.1} parent=0
    _
  %s5 = ssub.s32 1, %s3
  %s6 = scalar_select 0, %s5, %s3
  %s8 = sshll.u32 %s0, 4
  %s9 = int_to_ptr.hbm [resolvable:$true] %s8
  %11 = dma.hbm_to_smem %s9, 16, [#allocation4], [#allocation3]
  %13 = dma.done [#allocation3], 16
  %14 = sfence
  $region1: #{tpu_custom_call.1} parent=0
    #allocation5 [shape = 'u8[16384]{0}', space=vmem, size = 0x4000, scoped, tag = 'input window, operand 1']
    #allocation6 [shape = 's32[2]{0}', space=sflag, size = 0x8, scoped, tag = 'scoped memory for tpu_custom_call.1']
    #allocation7 [shape = 's32[2]{0}', space=sflag, size = 0x8, scoped, tag = 'scoped memory for tpu_custom_call.1']
    #allocation8 [shape = 'u8[4096]{0}', space=vmem, size = 0x1000, scoped, tag = 'output window, operand 0']
    %15 = vsyncpa [#allocation6], 0
    %s16 = scalar_lea.sflag [#allocation6], 1
    %17 = vsyncpa %s16, 0
    %18 = vsyncpa [#allocation7], 0
    %s19 = scalar_lea.sflag [#allocation7], 1
    %20 = vsyncpa %s19, 0
    loop: start=0, step=1, limit=4
    $region2: #{tpu_custom_call.1} parent=1 // loop_pre_header
      _
    $region3: #{tpu_custom_call.1} parent=1 // loop_header
      %s22 = sphi 0, %s26
      %p23 = scmp.ge.s32.totalorder %s22, 4
      %s29 = sphi 0, %s41
      %s30 = sphi 0, %s37
      %s31 = sphi 0, %s29
      %s32 = sphi 0, %s30
      %s33 = sphi 0, %s31
      %s34 = sphi 0, %s32
      %s46 = sphi 0, %s48
      %s49 = sphi 0, %s46
      %s50 = sphi 0, %s49
      %s66 = sphi 0, %s50
      %s72 = sphi 0, %s74
      %s75 = sphi 0, %s72
      %s76 = sphi 0, %s75
      %s92 = sphi 0, %s76
    $region4: #{tpu_custom_call.1} parent=1 // loop_header_branch
      %25 = sbr.rel (%p23) target = $region8
    $region5: #{tpu_custom_call.1} parent=1 // loop_body
      %s27 = ssub.s32 %s22, 1
      %s28 = ssub.s32 %s22, 2
      %s35 = sadd.s32 1, %s30
      %p36 = scmp.ge.s32.totalorder %s35, 1
      %s37 = scalar_select %p36, 0, %s35
      %s38 = sadd.s32 1, %s29
      %s39 = scalar_select %p36, %s38, %s29
      %p40 = scmp.ge.s32.totalorder %s39, 2
      %s41 = scalar_select %p40, 0, %s39
      %s42 = ssub.s32 %s29, %s41
      %s43 = ssub.s32 %s30, %s37
      %s44 = sor.u32 %s42, %s43
      %p45 = scmp.eq.s32.totalorder %s44, 0
      %s47 = sadd.s32 %s46, 1
      %s48 = scalar_select %p45, %s46, %s47
      %p51 = pneg %p45
      %p52 = scmp.eq.s32.totalorder %s22, 1
      %p53 = por %p51, %p52
      %p54 = scmp.ne.s32.totalorder %s46, %s49
      %p55 = scmp.eq.s32.totalorder %s22, 0
      %p56 = por %p54, %p55
      %p57 = scmp.ne.s32.totalorder %s46, %s49
      %p58 = scmp.eq.s32.totalorder %s27, 1
      %p59 = por %p57, %p58
      %p60 = scmp.ne.s32.totalorder %s49, %s50
      %p61 = scmp.eq.s32.totalorder %s27, 0
      %p62 = por %p60, %p61
      %p63 = scmp.ne.s32.totalorder %s49, %s50
      %p64 = scmp.eq.s32.totalorder %s28, 1
      %p65 = por %p63, %p64
      %p67 = scmp.ne.s32.totalorder %s50, %s66
      %p68 = scmp.eq.s32.totalorder %s28, 0
      %p69 = por %p67, %p68
      %s70 = ssub.s32 %s29, %s41
      %p71 = scmp.eq.s32.totalorder %s70, 0
      %s73 = sadd.s32 %s72, 1
      %s74 = scalar_select %p71, %s72, %s73
      %p77 = pneg %p71
      %p78 = scmp.eq.s32.totalorder %s22, 1
      %p79 = por %p77, %p78
      %p80 = scmp.ne.s32.totalorder %s72, %s75
      %p81 = scmp.eq.s32.totalorder %s22, 0
      %p82 = por %p80, %p81
      %p83 = scmp.ne.s32.totalorder %s72, %s75
      %p84 = scmp.eq.s32.totalorder %s27, 1
      %p85 = por %p83, %p84
      %p86 = scmp.ne.s32.totalorder %s75, %s76
      %p87 = scmp.eq.s32.totalorder %s27, 0
      %p88 = por %p86, %p87
      %p89 = scmp.ne.s32.totalorder %s75, %s76
      %p90 = scmp.eq.s32.totalorder %s28, 1
      %p91 = por %p89, %p90
      %p93 = scmp.ne.s32.totalorder %s76, %s92
      %p94 = scmp.eq.s32.totalorder %s28, 0
      %p95 = por %p93, %p94
      %p96 = scmp.le.s32.totalorder 1, %s22
      %p97 = scmp.lt.s32.totalorder %s22, 3
      %p98 = pnand %p96, %p97
      %p99 = pneg %p98
      // Predicated region
      $region9: #{tpu_custom_call.1} parent=5 // pred_check
        _
      $region10: #{tpu_custom_call.1} parent=5 // pred_check_branch
        %101 = sbr.rel (%p98) target = $region12
      $region11: #{tpu_custom_call.1} parent=5 // pred_region
        %s102 = ssub.s32 %s22, 1
      $region12: #{tpu_custom_call.1} parent=5 // pred_fallthru
        _
      %p103 = scmp.lt.s32.totalorder %s22, 2
      // Predicated region
      $region13: #{tpu_custom_call.1} parent=5 // pred_check
        %p104 = pneg %p103
      $region14: #{tpu_custom_call.1} parent=5 // pred_check_branch
        %106 = sbr.rel (%p104) target = $region16
      $region15: #{tpu_custom_call.1} parent=5 // pred_region
        // Predicated region
        $region17: #{tpu_custom_call.1} parent=15 // pred_check
          %p107 = pneg %p56
        $region18: #{tpu_custom_call.1} parent=15 // pred_check_branch
          %109 = sbr.rel (%p107) target = $region20
        $region19: #{tpu_custom_call.1} parent=15 // pred_region
          %s110 = sand.u32 %s46, 1
          %s111 = scalar_lea.sflag [#allocation6], %s110
          %s112 = sand.u32 %s46, 1
          %s113 = smul.addr %s112, 16
          %s114 = scalar_lea.vmem [#allocation5], %s113
          %s115 = smul.u32 4, %s30
          %117 = vsyncadd %s111, 0
          %s118 = smul.addr %s29, 4
          %s119 = sadd.s32 %s115, %s118
          %s120 = smul.addr %s119, 4
          %s121 = scalar_lea.hbm %s1, %s120
          %s122 = sshll.u32 %s121, 4
          %s123 = int_to_ptr.hbm [resolvable:$true] %s122
          %s124 = sshll.u32 %s114, 4
          %s125 = int_to_ptr.vmem [resolvable:$true] %s124
          %130 = dma.hbm_to_vmem [thread:$0]  %s123, 256, %s125, %s111, 64, 64, 4
        $region20: #{tpu_custom_call.1} parent=15 // pred_fallthru
          _
      $region16: #{tpu_custom_call.1} parent=5 // pred_fallthru
        _
      %p131 = scmp.le.s32.totalorder 1, %s22
      %p132 = scmp.lt.s32.totalorder %s22, 3
      %p133 = pnand %p131, %p132
      %p134 = pneg %p133
      // Predicated region
      $region21: #{tpu_custom_call.1} parent=5 // pred_check
        _
      $region22: #{tpu_custom_call.1} parent=5 // pred_check_branch
        %136 = sbr.rel (%p133) target = $region24
      $region23: #{tpu_custom_call.1} parent=5 // pred_region
        %s137 = ssub.s32 %s22, 1
        %s138 = sand.u32 %s49, 1
        %s139 = scalar_lea.sflag [#allocation6], %s138
        %s140 = sand.u32 %s49, 1
        %s141 = smul.addr %s140, 16
        %s142 = scalar_lea.vmem [#allocation5], %s141
        // Predicated region
        $region25: #{tpu_custom_call.1} parent=23 // pred_check
          %p143 = pneg %p62
        $region26: #{tpu_custom_call.1} parent=23 // pred_check_branch
          %145 = sbr.rel (%p143) target = $region28
        $region27: #{tpu_custom_call.1} parent=23 // pred_region
          %147 = dma.done %s139, 256
        $region28: #{tpu_custom_call.1} parent=23 // pred_fallthru
          _
        %s148 = sand.u32 %s49, 1
        %s149 = scalar_lea.sflag [#allocation6], %s148
        %s150 = sand.u32 %s49, 1
        %s151 = smul.addr %s150, 16
        %s152 = scalar_lea.vmem [#allocation5], %s151
        %p153 = pneg %p62
        %p154 = pneg %p59
        %p155 = pneg %p88
        %p156 = pneg %p85
        %s157 = sand.u32 %s75, 1
        %s158 = scalar_lea.sflag [#allocation7], %s157
        %s159 = sand.u32 %s75, 1
        %s160 = smul.addr %s159, 4
        %s161 = scalar_lea.vmem [#allocation8], %s160
        %s162 = smul.u32 4, %s32
        %v163 = vld [vmem:[%s142] sm:$0xf]
        %s164 = scalar_lea.vmem %s142, 4 [#allocation5]
        %v165 = vld [vmem:[%s164] sm:$0xf]
        %v166 = vadd.f32 %v163, %v165
        %v167 = vmax.f32 %v163, %v165
        %s168 = scalar_lea.vmem %s142, 8 [#allocation5]
        %v169 = vld [vmem:[%s168] sm:$0xf]
        %v170 = vadd.f32 %v166, %v169
        %v171 = vmax.f32 %v167, %v169
        %s172 = scalar_lea.vmem %s142, 12 [#allocation5]
        %v173 = vld [vmem:[%s172] sm:$0xf]
        %v174 = vadd.f32 %v170, %v173
        %v175 = vmax.f32 %v171, %v173
        %p176 = scmp.eq.s32.totalorder %s32, 0
        // Predicated region
        $region29: #{tpu_custom_call.1} parent=23 // pred_check
          %p177 = pneg %p176
        $region30: #{tpu_custom_call.1} parent=23 // pred_check_branch
          %179 = sbr.rel (%p177) target = $region32
        $region31: #{tpu_custom_call.1} parent=23 // pred_region
          %180 = vst [vmem:[#allocation2] sm:$0x3f] 0.0
          %vm181 = vcmask 275456
          %182 = vst.msk [vmem:[#allocation2 + $0x8] sm:$0x3f] %vm181, 0.0
          %183 = vst [vmem:[#allocation2 + $0x10] sm:$0x3f] 0.0
          %184 = vst.msk [vmem:[#allocation2 + $0x18] sm:$0x3f] %vm181, 0.0
          %v186 = vrot.slane %v174, 7
          %187 = vrot.lane.b32.xlu0 %v186, 17
          %v188 = vpop.permute.xlu0 %187
          %vm190 = vcmask 1044617
          %191 = vst.msk [vmem:[#allocation2] sm:$0x1e] %vm190, %v188
          %vm192 = vcmask 135169
          %193 = vst.msk [vmem:[#allocation2 + $0x8] sm:$0x1e] %vm192, %v188
          %v195 = vrot.slane %v175, 7
          %196 = vrot.lane.b32.xlu0 %v195, 17
          %v197 = vpop.permute.xlu0 %196
          %s199 = scalar_lea.vmem [#allocation2], 16
          %200 = vst.msk [vmem:[%s199] sm:$0x1e] %vm190, %v197
          %201 = vst.msk [vmem:[%s199 + $0x8] sm:$0x1e] %vm192, %v197
        $region32: #{tpu_custom_call.1} parent=23 // pred_fallthru
          _
        %p202 = scmp.gt.s32.totalorder %s32, 0
        // Predicated region
        $region33: #{tpu_custom_call.1} parent=23 // pred_check
          %p203 = pneg %p202
        $region34: #{tpu_custom_call.1} parent=23 // pred_check_branch
          %205 = sbr.rel (%p203) target = $region36
        $region35: #{tpu_custom_call.1} parent=23 // pred_region
          %v206 = vld [vmem:[#allocation2] sm:$0x1e]
          %v207 = vld [vmem:[#allocation2 + $0x8] sm:$0x1e]
          %s208 = scalar_lea.vmem [#allocation2], 16
          %v209 = vld [vmem:[%s208] sm:$0x1e]
          %v210 = vld [vmem:[%s208 + $0x8] sm:$0x1e]
          %v212 = vrot.slane %v174, 7
          %213 = vrot.lane.b32.xlu0 %v212, 17
          %v214 = vpop.permute.xlu0 %213
          %v216 = vadd.f32 %v206, %v214
          %v217 = vadd.f32 %v207, %v214
          %vm218 = vcmask 1044617
          %219 = vst.msk [vmem:[#allocation2] sm:$0x1e] %vm218, %v216
          %vm220 = vcmask 135169
          %221 = vst.msk [vmem:[#allocation2 + $0x8] sm:$0x1e] %vm220, %v217
          %v223 = vrot.slane %v175, 7
          %224 = vrot.lane.b32.xlu0 %v223, 17
          %v225 = vpop.permute.xlu0 %224
          %v227 = vmax.f32 %v209, %v225
          %v228 = vmax.f32 %v210, %v225
          %229 = vst.msk [vmem:[%s208] sm:$0x1e] %vm218, %v227
          %230 = vst.msk [vmem:[%s208 + $0x8] sm:$0x1e] %vm220, %v228
        $region36: #{tpu_custom_call.1} parent=23 // pred_fallthru
          _
        // Predicated region
        $region37: #{tpu_custom_call.1} parent=23 // pred_check
          %p231 = pneg %p176
        $region38: #{tpu_custom_call.1} parent=23 // pred_check_branch
          %233 = sbr.rel (%p231) target = $region40
        $region39: #{tpu_custom_call.1} parent=23 // pred_region
          %v234 = vlaneseq
          %v235 = vand.u32 %v234, 127
          %vm236 = vcmp.lt.s32.totalorder %v235, 0
          %v237 = vsub.s32 0, %v235
          %v238 = vsel %vm236, %v237, %v235
          %v239 = vshrl.u32 %v238, 4
          %v240 = vand.u32 %v238, 15
          %v241 = vsub.s32 0, %v240
          %v242 = vsel %vm236, %v241, %v240
          %vm243 = vcmp.ne.s32.totalorder %v242, 0
          %vm244 = vcmp.lt.s32.totalorder %v242, 0
          %vm245 = vmand %vm244, %vm243
          %v246 = vadd.s32 %v242, 16
          %v247 = vsel %vm245, %v246, %v242
          %v248 = vadd.s32 %v247, 4294967295
          %vm249 = vcmp.ge.s32.totalorder %v248, 0
          %vm250 = vcmp.lt.s32.totalorder %v248, 16
          %vm251 = vmand %vm249, %vm250
          %v252 = vsel %vm251, 1, 0
          %v253 = vcvt.s32.f32 %v252
          %vm254 = vcmp.ge.s32.totalorder %v247, 0
          %vm255 = vcmp.lt.s32.totalorder %v247, 16
          %vm256 = vmand %vm254, %vm255
          %v257 = vsel %vm256, 1, 0
          %v258 = vcvt.s32.f32 %v257
          %v259 = vadd.s32 %v247, 1
          %vm260 = vcmp.ge.s32.totalorder %v259, 0
          %vm261 = vcmp.lt.s32.totalorder %v259, 16
          %vm262 = vmand %vm260, %vm261
          %v263 = vsel %vm262, 1, 0
          %v264 = vcvt.s32.f32 %v263
          %v265 = vld [vmem:[#allocation2] sm:$0x3f]
          %v266 = vmul.f32 %v265, %v253
          %s267 = sld [smem:[#allocation4]]
          %v268 = vstv %s267
          %v269 = vmul.f32 %v268, %v266
          %v270 = vadd.f32 %v269, 0.0
          %s271 = sld [smem:[#allocation4 + $0x9]]
          %v272 = vstv %s271
          %v273 = vmul.f32 %v272, %v266
          %v274 = vadd.f32 %v273, 0.0
          %s275 = sld [smem:[#allocation4 + $0x12]]
          %v276 = vstv %s275
          %v277 = vmul.f32 %v276, %v266
          %v278 = vadd.f32 %v277, 0.0
          %v279 = vld [vmem:[#allocation2] sm:$0x3f]
          %v280 = vld [vmem:[#allocation2 + $0x8] sm:$0x3f]
          %282 = vrot.lane.b32.xlu0 %v258, 1
          %v283 = vpop.permute.xlu0 %282
          %v285 = vmul.f32 %v279, %v283
          %v286 = vmul.f32 %v280, %v283
          %s287 = sld [smem:[#allocation4 + $0x1]]
          %v288 = vstv %s287
          %v289 = vmul.f32 %v288, %v285
          %v290 = vmul.f32 %v288, %v286
          %v291 = vadd.f32 %v289, 0.0
          %v292 = vadd.f32 %v290, 0.0
          %s293 = sld [smem:[#allocation4 + $0xa]]
          %v294 = vstv %s293
          %v295 = vmul.f32 %v294, %v285
          %v296 = vmul.f32 %v294, %v286
          %v299 = vrot.slane %v295, 1
          %v300 = vrot.slane %v296, 1
          %301 = vrot.lane.b32.xlu0 %v299, 127
          %v302 = vpop.permute.xlu0 %301
          %303 = vrot.lane.b32.xlu0 %v300, 127
          %v304 = vpop.permute.xlu0 %303
          %vm305 = vcmask 1039360
          %v306 = vsel %vm305, %v302, %v304
          %v308 = vadd.f32 %v270, %v306
          %s309 = sld [smem:[#allocation4 + $0x13]]
          %v310 = vstv %s309
          %v311 = vmul.f32 %v310, %v285
          %v312 = vmul.f32 %v310, %v286
          %v315 = vrot.slane %v311, 1
          %v316 = vrot.slane %v312, 1
          %317 = vrot.lane.b32.xlu0 %v315, 127
          %v318 = vpop.permute.xlu0 %317
          %319 = vrot.lane.b32.xlu0 %v316, 127
          %v320 = vpop.permute.xlu0 %319
          %v321 = vsel %vm305, %v318, %v320
          %v323 = vadd.f32 %v274, %v321
          %325 = vrot.lane.b32.xlu0 %v264, 2
          %v326 = vpop.permute.xlu0 %325
          %v328 = vmul.f32 %v279, %v326
          %v329 = vmul.f32 %v280, %v326
          %s330 = sld [smem:[#allocation4 + $0x2]]
          %v331 = vstv %s330
          %v332 = vmul.f32 %v331, %v328
          %v333 = vmul.f32 %v331, %v329
          %v336 = vrot.slane %v332, 6
          %v337 = vrot.slane %v333, 6
          %338 = vrot.lane.b32.xlu0 %v336, 126
          %v339 = vpop.permute.xlu0 %338
          %340 = vrot.lane.b32.xlu0 %v337, 126
          %v341 = vpop.permute.xlu0 %340
          %vm342 = vcmask 1031168
          %v343 = vsel %vm342, %v339, %v341
          %v345 = vadd.f32 %v278, %v343
          %s346 = sld [smem:[#allocation4 + $0xb]]
          %v347 = vstv %s346
          %v348 = vmul.f32 %v347, %v328
          %v349 = vmul.f32 %v347, %v329
          %v352 = vrot.slane %v348, 1
          %v353 = vrot.slane %v349, 1
          %354 = vrot.lane.b32.xlu0 %v352, 127
          %v355 = vpop.permute.xlu0 %354
          %356 = vrot.lane.b32.xlu0 %v353, 127
          %v357 = vpop.permute.xlu0 %356
          %v358 = vsel %vm305, %v355, %v357
          %v361 = vadd.f32 %v291, %v358
          %v362 = vadd.f32 %v292, %v357
          %s363 = sld [smem:[#allocation4 + $0x14]]
          %v364 = vstv %s363
          %v365 = vmul.f32 %v364, %v328
          %v366 = vmul.f32 %v364, %v329
          %v369 = vrot.slane %v365, 2
          %v370 = vrot.slane %v366, 2
          %371 = vrot.lane.b32.xlu0 %v369, 126
          %v372 = vpop.permute.xlu0 %371
          %373 = vrot.lane.b32.xlu0 %v370, 126
          %v374 = vpop.permute.xlu0 %373
          %v375 = vsel %vm342, %v372, %v374
          %v377 = vadd.f32 %v308, %v375
          %379 = vrot.lane.b32.xlu0 %v253, 16
          %v380 = vpop.permute.xlu0 %379
          %v382 = vmul.f32 %v279, %v380
          %v383 = vmul.f32 %v280, %v380
          %s384 = sld [smem:[#allocation4 + $0x3]]
          %v385 = vstv %s384
          %v386 = vmul.f32 %v385, %v382
          %v387 = vmul.f32 %v385, %v383
          %v390 = vrot.slane %v386, 7
          %v391 = vrot.slane %v387, 7
          %392 = vrot.lane.b32.xlu0 %v390, 112
          %v393 = vpop.permute.xlu0 %392
          %394 = vrot.lane.b32.xlu0 %v391, 112
          %v395 = vpop.permute.xlu0 %394
          %vm396 = vcmask 916480
          %v397 = vsel %vm396, %v393, %v395
          %v399 = vadd.f32 %v323, %v397
          %s400 = sld [smem:[#allocation4 + $0xc]]
          %v401 = vstv %s400
          %v402 = vmul.f32 %v401, %v382
          %v403 = vmul.f32 %v401, %v383
          %v406 = vrot.slane %v402, 7
          %v407 = vrot.slane %v403, 7
          %408 = vrot.lane.b32.xlu0 %v406, 112
          %v409 = vpop.permute.xlu0 %408
          %410 = vrot.lane.b32.xlu0 %v407, 112
          %v411 = vpop.permute.xlu0 %410
          %v412 = vsel %vm396, %v409, %v411
          %v414 = vadd.f32 %v345, %v412
          %s415 = sld [smem:[#allocation4 + $0x15]]
          %v416 = vstv %s415
          %v417 = vmul.f32 %v416, %v382
          %v418 = vmul.f32 %v416, %v383
          %v421 = vrot.slane %v417, 2
          %v422 = vrot.slane %v418, 2
          %423 = vrot.lane.b32.xlu0 %v421, 113
          %v424 = vpop.permute.xlu0 %423
          %425 = vrot.lane.b32.xlu0 %v422, 113
          %v426 = vpop.permute.xlu0 %425
          %vm427 = vcmask 924672
          %v428 = vsel %vm427, %v424, %v426
          %v431 = vadd.f32 %v361, %v428
          %v432 = vadd.f32 %v362, %v426
          %433 = vrot.lane.b32.xlu0 %v258, 17
          %v434 = vpop.permute.xlu0 %433
          %v436 = vmul.f32 %v279, %v434
          %v437 = vmul.f32 %v280, %v434
          %s438 = sld [smem:[#allocation4 + $0x4]]
          %v439 = vstv %s438
          %v440 = vmul.f32 %v439, %v436
          %v441 = vmul.f32 %v439, %v437
          %444 = vrot.lane.b32.xlu0 %v440, 111
          %v445 = vpop.permute.xlu0 %444
          %446 = vrot.lane.b32.xlu0 %v441, 111
          %v447 = vpop.permute.xlu0 %446
          %vm448 = vcmask 908288
          %v449 = vsel %vm448, %v445, %v447
          %v451 = vadd.f32 %v377, %v449
          %s452 = sld [smem:[#allocation4 + $0xd]]
          %v453 = vstv %s452
          %v454 = vmul.f32 %v453, %v436
          %v455 = vmul.f32 %v453, %v437
          %458 = vrot.lane.b32.xlu0 %v454, 111
          %v459 = vpop.permute.xlu0 %458
          %460 = vrot.lane.b32.xlu0 %v455, 111
          %v461 = vpop.permute.xlu0 %460
          %v462 = vsel %vm448, %v459, %v461
          %v464 = vadd.f32 %v399, %v462
          %s465 = sld [smem:[#allocation4 + $0x16]]
          %v466 = vstv %s465
          %v467 = vmul.f32 %v466, %v436
          %v468 = vmul.f32 %v466, %v437
          %471 = vrot.lane.b32.xlu0 %v467, 111
          %v472 = vpop.permute.xlu0 %471
          %473 = vrot.lane.b32.xlu0 %v468, 111
          %v474 = vpop.permute.xlu0 %473
          %v475 = vsel %vm448, %v472, %v474
          %v477 = vadd.f32 %v414, %v475
          %478 = vrot.lane.b32.xlu0 %v264, 18
          %v479 = vpop.permute.xlu0 %478
          %v481 = vmul.f32 %v279, %v479
          %v482 = vmul.f32 %v280, %v479
          %s483 = sld [smem:[#allocation4 + $0x5]]
          %v484 = vstv %s483
          %v485 = vmul.f32 %v484, %v481
          %v486 = vmul.f32 %v484, %v482
          %489 = vrot.lane.b32.xlu0 %v485, 111
          %v490 = vpop.permute.xlu0 %489
          %491 = vrot.lane.b32.xlu0 %v486, 111
          %v492 = vpop.permute.xlu0 %491
          %v493 = vsel %vm448, %v490, %v492
          %v496 = vadd.f32 %v431, %v493
          %v497 = vadd.f32 %v432, %v492
          %s498 = sld [smem:[#allocation4 + $0xe]]
          %v499 = vstv %s498
          %v500 = vmul.f32 %v499, %v481
          %v501 = vmul.f32 %v499, %v482
          %v504 = vrot.slane %v500, 1
          %v505 = vrot.slane %v501, 1
          %506 = vrot.lane.b32.xlu0 %v504, 110
          %v507 = vpop.permute.xlu0 %506
          %508 = vrot.lane.b32.xlu0 %v505, 110
          %v509 = vpop.permute.xlu0 %508
          %vm510 = vcmask 900096
          %v511 = vsel %vm510, %v507, %v509
          %v513 = vadd.f32 %v451, %v511
          %s514 = sld [smem:[#allocation4 + $0x17]]
          %v515 = vstv %s514
          %v516 = vmul.f32 %v515, %v481
          %v517 = vmul.f32 %v515, %v482
          %v520 = vrot.slane %v516, 1
          %v521 = vrot.slane %v517, 1
          %522 = vrot.lane.b32.xlu0 %v520, 110
          %v523 = vpop.permute.xlu0 %522
          %524 = vrot.lane.b32.xlu0 %v521, 110
          %v525 = vpop.permute.xlu0 %524
          %v526 = vsel %vm510, %v523, %v525
          %v528 = vadd.f32 %v464, %v526
          %529 = vrot.lane.b32.xlu0 %v253, 32
          %v530 = vpop.permute.xlu0 %529
          %v532 = vmul.f32 %v279, %v530
          %v533 = vmul.f32 %v280, %v530
          %s534 = sld [smem:[#allocation4 + $0x6]]
          %v535 = vstv %s534
          %v536 = vmul.f32 %v535, %v532
          %v537 = vmul.f32 %v535, %v533
          %v540 = vrot.slane %v536, 6
          %v541 = vrot.slane %v537, 6
          %542 = vrot.lane.b32.xlu0 %v540, 96
          %v543 = vpop.permute.xlu0 %542
          %544 = vrot.lane.b32.xlu0 %v541, 96
          %v545 = vpop.permute.xlu0 %544
          %vm546 = vcmask 785408
          %v547 = vsel %vm546, %v543, %v545
          %v549 = vadd.f32 %v477, %v547
          %s550 = sld [smem:[#allocation4 + $0xf]]
          %v551 = vstv %s550
          %v552 = vmul.f32 %v551, %v532
          %v553 = vmul.f32 %v551, %v533
          %v556 = vrot.slane %v552, 1
          %v557 = vrot.slane %v553, 1
          %558 = vrot.lane.b32.xlu0 %v556, 97
          %v559 = vpop.permute.xlu0 %558
          %560 = vrot.lane.b32.xlu0 %v557, 97
          %v561 = vpop.permute.xlu0 %560
          %vm562 = vcmask 793600
          %v563 = vsel %vm562, %v559, %v561
          %v566 = vadd.f32 %v496, %v563
          %v567 = vadd.f32 %v497, %v561
          %s568 = sld [smem:[#allocation4 + $0x18]]
          %v569 = vstv %s568
          %v570 = vmul.f32 %v569, %v532
          %v571 = vmul.f32 %v569, %v533
          %v574 = vrot.slane %v570, 2
          %v575 = vrot.slane %v571, 2
          %576 = vrot.lane.b32.xlu0 %v574, 96
          %v577 = vpop.permute.xlu0 %576
          %578 = vrot.lane.b32.xlu0 %v575, 96
          %v579 = vpop.permute.xlu0 %578
          %v580 = vsel %vm546, %v577, %v579
          %v582 = vadd.f32 %v513, %v580
          %583 = vrot.lane.b32.xlu0 %v258, 33
          %v584 = vpop.permute.xlu0 %583
          %v586 = vmul.f32 %v279, %v584
          %v587 = vmul.f32 %v280, %v584
          %s588 = sld [smem:[#allocation4 + $0x7]]
          %v589 = vstv %s588
          %v590 = vmul.f32 %v589, %v586
          %v591 = vmul.f32 %v589, %v587
          %v594 = vrot.slane %v590, 7
          %v595 = vrot.slane %v591, 7
          %596 = vrot.lane.b32.xlu0 %v594, 95
          %v597 = vpop.permute.xlu0 %596
          %598 = vrot.lane.b32.xlu0 %v595, 95
          %v599 = vpop.permute.xlu0 %598
          %vm600 = vcmask 777216
          %v601 = vsel %vm600, %v597, %v599
          %v603 = vadd.f32 %v528, %v601
          %s604 = sld [smem:[#allocation4 + $0x10]]
          %v605 = vstv %s604
          %v606 = vmul.f32 %v605, %v586
          %v607 = vmul.f32 %v605, %v587
          %v610 = vrot.slane %v606, 7
          %v611 = vrot.slane %v607, 7
          %612 = vrot.lane.b32.xlu0 %v610, 95
          %v613 = vpop.permute.xlu0 %612
          %614 = vrot.lane.b32.xlu0 %v611, 95
          %v615 = vpop.permute.xlu0 %614
          %v616 = vsel %vm600, %v613, %v615
          %v618 = vadd.f32 %v549, %v616
          %s619 = sld [smem:[#allocation4 + $0x19]]
          %v620 = vstv %s619
          %v621 = vmul.f32 %v620, %v586
          %v622 = vmul.f32 %v620, %v587
          %v625 = vrot.slane %v621, 2
          %v626 = vrot.slane %v622, 2
          %627 = vrot.lane.b32.xlu0 %v625, 96
          %v628 = vpop.permute.xlu0 %627
          %629 = vrot.lane.b32.xlu0 %v626, 96
          %v630 = vpop.permute.xlu0 %629
          %v631 = vsel %vm546, %v628, %v630
          %v634 = vadd.f32 %v566, %v631
          %v635 = vadd.f32 %v567, %v630
          %636 = vrot.lane.b32.xlu0 %v264, 34
          %v637 = vpop.permute.xlu0 %636
          %v639 = vmul.f32 %v279, %v637
          %v640 = vmul.f32 %v280, %v637
          %s641 = sld [smem:[#allocation4 + $0x8]]
          %v642 = vstv %s641
          %v643 = vmul.f32 %v642, %v639
          %v644 = vmul.f32 %v642, %v640
          %647 = vrot.lane.b32.xlu0 %v643, 94
          %v648 = vpop.permute.xlu0 %647
          %649 = vrot.lane.b32.xlu0 %v644, 94
          %v650 = vpop.permute.xlu0 %649
          %vm651 = vcmask 769024
          %v652 = vsel %vm651, %v648, %v650
          %v654 = vadd.f32 %v582, %v652
          %s655 = sld [smem:[#allocation4 + $0x11]]
          %v656 = vstv %s655
          %v657 = vmul.f32 %v656, %v639
          %v658 = vmul.f32 %v656, %v640
          %661 = vrot.lane.b32.xlu0 %v657, 94
          %v662 = vpop.permute.xlu0 %661
          %663 = vrot.lane.b32.xlu0 %v658, 94
          %v664 = vpop.permute.xlu0 %663
          %v665 = vsel %vm651, %v662, %v664
          %v667 = vadd.f32 %v603, %v665
          %s668 = sld [smem:[#allocation4 + $0x1a]]
          %v669 = vstv %s668
          %v670 = vmul.f32 %v669, %v639
          %v671 = vmul.f32 %v669, %v640
          %674 = vrot.lane.b32.xlu0 %v670, 94
          %v675 = vpop.permute.xlu0 %674
          %676 = vrot.lane.b32.xlu0 %v671, 94
          %v677 = vpop.permute.xlu0 %676
          %v678 = vsel %vm651, %v675, %v677
          %v680 = vadd.f32 %v618, %v678
          %s681 = scalar_lea.vmem [#allocation2], 16
          %v682 = vld [vmem:[%s681] sm:$0x3f]
          %v683 = vmul.f32 %v682, %v253
          %s684 = sld [smem:[#allocation4 + $0x1b]]
          %v685 = vstv %s684
          %v686 = vmul.f32 %v685, %v683
          %688 = vrot.lane.b32.xlu0 %v686, 1
          %v689 = vpop.permute.xlu0 %688
          %v691 = vadd.f32 %v634, %v689
          %v692 = vadd.f32 %v635, %v689
          %s693 = sld [smem:[#allocation4 + $0x24]]
          %v694 = vstv %s693
          %v695 = vmul.f32 %v694, %v683
          %v697 = vrot.slane %v695, 1
          %v699 = vadd.f32 %v654, %v697
          %s700 = sld [smem:[#allocation4 + $0x2d]]
          %v701 = vstv %s700
          %v702 = vmul.f32 %v701, %v683
          %v704 = vrot.slane %v702, 1
          %v706 = vadd.f32 %v667, %v704
          %v707 = vld [vmem:[%s681] sm:$0x3f]
          %v708 = vld [vmem:[%s681 + $0x8] sm:$0x3f]
          %v709 = vmul.f32 %v707, %v283
          %v710 = vmul.f32 %v708, %v283
          %s711 = sld [smem:[#allocation4 + $0x1c]]
          %v712 = vstv %s711
          %v713 = vmul.f32 %v712, %v709
          %v714 = vmul.f32 %v712, %v710
          %v717 = vrot.slane %v713, 6
          %v718 = vrot.slane %v714, 6
          %719 = vrot.lane.b32.xlu0 %v717, 127
          %v720 = vpop.permute.xlu0 %719
          %721 = vrot.lane.b32.xlu0 %v718, 127
          %v722 = vpop.permute.xlu0 %721
          %v723 = vsel %vm305, %v720, %v722
          %v725 = vadd.f32 %v680, %v723
          %s726 = sld [smem:[#allocation4 + $0x25]]
          %v727 = vstv %s726
          %v728 = vmul.f32 %v727, %v709
          %v729 = vmul.f32 %v727, %v710
          %v732 = vrot.slane %v728, 1
          %v733 = vrot.slane %v729, 1
          %v736 = vadd.f32 %v691, %v732
          %v737 = vadd.f32 %v692, %v733
          %s738 = sld [smem:[#allocation4 + $0x2e]]
          %v739 = vstv %s738
          %v740 = vmul.f32 %v739, %v709
          %v741 = vmul.f32 %v739, %v710
          %v744 = vrot.slane %v740, 2
          %v745 = vrot.slane %v741, 2
          %746 = vrot.lane.b32.xlu0 %v744, 127
          %v747 = vpop.permute.xlu0 %746
          %748 = vrot.lane.b32.xlu0 %v745, 127
          %v749 = vpop.permute.xlu0 %748
          %v750 = vsel %vm305, %v747, %v749
          %v752 = vadd.f32 %v699, %v750
          %v753 = vmul.f32 %v707, %v326
          %v754 = vmul.f32 %v708, %v326
          %s755 = sld [smem:[#allocation4 + $0x1d]]
          %v756 = vstv %s755
          %v757 = vmul.f32 %v756, %v753
          %v758 = vmul.f32 %v756, %v754
          %v761 = vrot.slane %v757, 7
          %v762 = vrot.slane %v758, 7
          %763 = vrot.lane.b32.xlu0 %v761, 126
          %v764 = vpop.permute.xlu0 %763
          %765 = vrot.lane.b32.xlu0 %v762, 126
          %v766 = vpop.permute.xlu0 %765
          %v767 = vsel %vm342, %v764, %v766
          %v769 = vadd.f32 %v706, %v767
          %s770 = sld [smem:[#allocation4 + $0x26]]
          %v771 = vstv %s770
          %v772 = vmul.f32 %v771, %v753
          %v773 = vmul.f32 %v771, %v754
          %v776 = vrot.slane %v772, 7
          %v777 = vrot.slane %v773, 7
          %778 = vrot.lane.b32.xlu0 %v776, 126
          %v779 = vpop.permute.xlu0 %778
          %780 = vrot.lane.b32.xlu0 %v777, 126
          %v781 = vpop.permute.xlu0 %780
          %v782 = vsel %vm342, %v779, %v781
          %v784 = vadd.f32 %v725, %v782
          %s785 = sld [smem:[#allocation4 + $0x2f]]
          %v786 = vstv %s785
          %v787 = vmul.f32 %v786, %v753
          %v788 = vmul.f32 %v786, %v754
          %v791 = vrot.slane %v787, 2
          %v792 = vrot.slane %v788, 2
          %793 = vrot.lane.b32.xlu0 %v791, 127
          %v794 = vpop.permute.xlu0 %793
          %795 = vrot.lane.b32.xlu0 %v792, 127
          %v796 = vpop.permute.xlu0 %795
          %v797 = vsel %vm305, %v794, %v796
          %v800 = vadd.f32 %v736, %v797
          %v801 = vadd.f32 %v737, %v796
          %v802 = vmul.f32 %v707, %v380
          %v803 = vmul.f32 %v708, %v380
          %s804 = sld [smem:[#allocation4 + $0x1e]]
          %v805 = vstv %s804
          %v806 = vmul.f32 %v805, %v802
          %v807 = vmul.f32 %v805, %v803
          %810 = vrot.lane.b32.xlu0 %v806, 112
          %v811 = vpop.permute.xlu0 %810
          %812 = vrot.lane.b32.xlu0 %v807, 112
          %v813 = vpop.permute.xlu0 %812
          %v814 = vsel %vm396, %v811, %v813
          %v816 = vadd.f32 %v752, %v814
          %s817 = sld [smem:[#allocation4 + $0x27]]
          %v818 = vstv %s817
          %v819 = vmul.f32 %v818, %v802
          %v820 = vmul.f32 %v818, %v803
          %823 = vrot.lane.b32.xlu0 %v819, 112
          %v824 = vpop.permute.xlu0 %823
          %825 = vrot.lane.b32.xlu0 %v820, 112
          %v826 = vpop.permute.xlu0 %825
          %v827 = vsel %vm396, %v824, %v826
          %v829 = vadd.f32 %v769, %v827
          %s830 = sld [smem:[#allocation4 + $0x30]]
          %v831 = vstv %s830
          %v832 = vmul.f32 %v831, %v802
          %v833 = vmul.f32 %v831, %v803
          %836 = vrot.lane.b32.xlu0 %v832, 112
          %v837 = vpop.permute.xlu0 %836
          %838 = vrot.lane.b32.xlu0 %v833, 112
          %v839 = vpop.permute.xlu0 %838
          %v840 = vsel %vm396, %v837, %v839
          %v842 = vadd.f32 %v784, %v840
          %v843 = vmul.f32 %v707, %v434
          %v844 = vmul.f32 %v708, %v434
          %s845 = sld [smem:[#allocation4 + $0x1f]]
          %v846 = vstv %s845
          %v847 = vmul.f32 %v846, %v843
          %v848 = vmul.f32 %v846, %v844
          %851 = vrot.lane.b32.xlu0 %v847, 112
          %v852 = vpop.permute.xlu0 %851
          %853 = vrot.lane.b32.xlu0 %v848, 112
          %v854 = vpop.permute.xlu0 %853
          %v855 = vsel %vm396, %v852, %v854
          %v858 = vadd.f32 %v800, %v855
          %v859 = vadd.f32 %v801, %v854
          %s860 = sld [smem:[#allocation4 + $0x28]]
          %v861 = vstv %s860
          %v862 = vmul.f32 %v861, %v843
          %v863 = vmul.f32 %v861, %v844
          %v866 = vrot.slane %v862, 1
          %v867 = vrot.slane %v863, 1
          %868 = vrot.lane.b32.xlu0 %v866, 111
          %v869 = vpop.permute.xlu0 %868
          %870 = vrot.lane.b32.xlu0 %v867, 111
          %v871 = vpop.permute.xlu0 %870
          %v872 = vsel %vm448, %v869, %v871
          %v874 = vadd.f32 %v816, %v872
          %s875 = sld [smem:[#allocation4 + $0x31]]
          %v876 = vstv %s875
          %v877 = vmul.f32 %v876, %v843
          %v878 = vmul.f32 %v876, %v844
          %v881 = vrot.slane %v877, 1
          %v882 = vrot.slane %v878, 1
          %883 = vrot.lane.b32.xlu0 %v881, 111
          %v884 = vpop.permute.xlu0 %883
          %885 = vrot.lane.b32.xlu0 %v882, 111
          %v886 = vpop.permute.xlu0 %885
          %v887 = vsel %vm448, %v884, %v886
          %v889 = vadd.f32 %v829, %v887
          %v890 = vmul.f32 %v707, %v479
          %v891 = vmul.f32 %v708, %v479
          %s892 = sld [smem:[#allocation4 + $0x20]]
          %v893 = vstv %s892
          %v894 = vmul.f32 %v893, %v890
          %v895 = vmul.f32 %v893, %v891
          %v898 = vrot.slane %v894, 6
          %v899 = vrot.slane %v895, 6
          %900 = vrot.lane.b32.xlu0 %v898, 110
          %v901 = vpop.permute.xlu0 %900
          %902 = vrot.lane.b32.xlu0 %v899, 110
          %v903 = vpop.permute.xlu0 %902
          %v904 = vsel %vm510, %v901, %v903
          %v906 = vadd.f32 %v842, %v904
          %s907 = sld [smem:[#allocation4 + $0x29]]
          %v908 = vstv %s907
          %v909 = vmul.f32 %v908, %v890
          %v910 = vmul.f32 %v908, %v891
          %v913 = vrot.slane %v909, 1
          %v914 = vrot.slane %v910, 1
          %915 = vrot.lane.b32.xlu0 %v913, 111
          %v916 = vpop.permute.xlu0 %915
          %917 = vrot.lane.b32.xlu0 %v914, 111
          %v918 = vpop.permute.xlu0 %917
          %v919 = vsel %vm448, %v916, %v918
          %v922 = vadd.f32 %v858, %v919
          %v923 = vadd.f32 %v859, %v918
          %s924 = sld [smem:[#allocation4 + $0x32]]
          %v925 = vstv %s924
          %v926 = vmul.f32 %v925, %v890
          %v927 = vmul.f32 %v925, %v891
          %v930 = vrot.slane %v926, 2
          %v931 = vrot.slane %v927, 2
          %932 = vrot.lane.b32.xlu0 %v930, 110
          %v933 = vpop.permute.xlu0 %932
          %934 = vrot.lane.b32.xlu0 %v931, 110
          %v935 = vpop.permute.xlu0 %934
          %v936 = vsel %vm510, %v933, %v935
          %v938 = vadd.f32 %v874, %v936
          %v939 = vmul.f32 %v707, %v530
          %v940 = vmul.f32 %v708, %v530
          %s941 = sld [smem:[#allocation4 + $0x21]]
          %v942 = vstv %s941
          %v943 = vmul.f32 %v942, %v939
          %v944 = vmul.f32 %v942, %v940
          %v947 = vrot.slane %v943, 7
          %v948 = vrot.slane %v944, 7
          %949 = vrot.lane.b32.xlu0 %v947, 96
          %v950 = vpop.permute.xlu0 %949
          %951 = vrot.lane.b32.xlu0 %v948, 96
          %v952 = vpop.permute.xlu0 %951
          %v953 = vsel %vm546, %v950, %v952
          %v955 = vadd.f32 %v889, %v953
          %s956 = sld [smem:[#allocation4 + $0x2a]]
          %v957 = vstv %s956
          %v958 = vmul.f32 %v957, %v939
          %v959 = vmul.f32 %v957, %v940
          %v962 = vrot.slane %v958, 7
          %v963 = vrot.slane %v959, 7
          %964 = vrot.lane.b32.xlu0 %v962, 96
          %v965 = vpop.permute.xlu0 %964
          %966 = vrot.lane.b32.xlu0 %v963, 96
          %v967 = vpop.permute.xlu0 %966
          %v968 = vsel %vm546, %v965, %v967
          %v970 = vadd.f32 %v906, %v968
          %s971 = sld [smem:[#allocation4 + $0x33]]
          %v972 = vstv %s971
          %v973 = vmul.f32 %v972, %v939
          %v974 = vmul.f32 %v972, %v940
          %v977 = vrot.slane %v973, 2
          %v978 = vrot.slane %v974, 2
          %979 = vrot.lane.b32.xlu0 %v977, 97
          %v980 = vpop.permute.xlu0 %979
          %981 = vrot.lane.b32.xlu0 %v978, 97
          %v982 = vpop.permute.xlu0 %981
          %v983 = vsel %vm562, %v980, %v982
          %v986 = vadd.f32 %v922, %v983
          %v987 = vadd.f32 %v923, %v982
          %v988 = vmul.f32 %v707, %v584
          %v989 = vmul.f32 %v708, %v584
          %s990 = sld [smem:[#allocation4 + $0x22]]
          %v991 = vstv %s990
          %v992 = vmul.f32 %v991, %v988
          %v993 = vmul.f32 %v991, %v989
          %996 = vrot.lane.b32.xlu0 %v992, 95
          %v997 = vpop.permute.xlu0 %996
          %998 = vrot.lane.b32.xlu0 %v993, 95
          %v999 = vpop.permute.xlu0 %998
          %v1000 = vsel %vm600, %v997, %v999
          %v1002 = vadd.f32 %v938, %v1000
          %s1003 = sld [smem:[#allocation4 + $0x2b]]
          %v1004 = vstv %s1003
          %v1005 = vmul.f32 %v1004, %v988
          %v1006 = vmul.f32 %v1004, %v989
          %1009 = vrot.lane.b32.xlu0 %v1005, 95
          %v1010 = vpop.permute.xlu0 %1009
          %1011 = vrot.lane.b32.xlu0 %v1006, 95
          %v1012 = vpop.permute.xlu0 %1011
          %v1013 = vsel %vm600, %v1010, %v1012
          %v1015 = vadd.f32 %v955, %v1013
          %s1016 = sld [smem:[#allocation4 + $0x34]]
          %v1017 = vstv %s1016
          %v1018 = vmul.f32 %v1017, %v988
          %v1019 = vmul.f32 %v1017, %v989
          %1022 = vrot.lane.b32.xlu0 %v1018, 95
          %v1023 = vpop.permute.xlu0 %1022
          %1024 = vrot.lane.b32.xlu0 %v1019, 95
          %v1025 = vpop.permute.xlu0 %1024
          %v1026 = vsel %vm600, %v1023, %v1025
          %v1028 = vadd.f32 %v970, %v1026
          %v1029 = vmul.f32 %v707, %v637
          %v1030 = vmul.f32 %v708, %v637
          %s1031 = sld [smem:[#allocation4 + $0x23]]
          %v1032 = vstv %s1031
          %v1033 = vmul.f32 %v1032, %v1029
          %v1034 = vmul.f32 %v1032, %v1030
          %1037 = vrot.lane.b32.xlu0 %v1033, 95
          %v1038 = vpop.permute.xlu0 %1037
          %1039 = vrot.lane.b32.xlu0 %v1034, 95
          %v1040 = vpop.permute.xlu0 %1039
          %v1041 = vsel %vm600, %v1038, %v1040
          %v1044 = vadd.f32 %v986, %v1041
          %v1045 = vadd.f32 %v987, %v1040
          %s1046 = sld [smem:[#allocation4 + $0x2c]]
          %v1047 = vstv %s1046
          %v1048 = vmul.f32 %v1047, %v1029
          %v1049 = vmul.f32 %v1047, %v1030
          %v1052 = vrot.slane %v1048, 1
          %v1053 = vrot.slane %v1049, 1
          %1054 = vrot.lane.b32.xlu0 %v1052, 94
          %v1055 = vpop.permute.xlu0 %1054
          %1056 = vrot.lane.b32.xlu0 %v1053, 94
          %v1057 = vpop.permute.xlu0 %1056
          %v1058 = vsel %vm651, %v1055, %v1057
          %v1060 = vadd.f32 %v1002, %v1058
          %s1061 = sld [smem:[#allocation4 + $0x35]]
          %v1062 = vstv %s1061
          %v1063 = vmul.f32 %v1062, %v1029
          %v1064 = vmul.f32 %v1062, %v1030
          %v1067 = vrot.slane %v1063, 1
          %v1068 = vrot.slane %v1064, 1
          %1069 = vrot.lane.b32.xlu0 %v1067, 94
          %v1070 = vpop.permute.xlu0 %1069
          %1071 = vrot.lane.b32.xlu0 %v1068, 94
          %v1072 = vpop.permute.xlu0 %1071
          %v1073 = vsel %vm651, %v1070, %v1072
          %v1075 = vadd.f32 %v1015, %v1073
          %v1077 = vrot.slane %v1075, 1
          %v1079 = vadd.f32 %v1060, %v1077
          %v1082 = vrot.slane %v1044, 6
          %v1083 = vrot.slane %v1045, 6
          %1084 = vrot.lane.b32.xlu0 %v1082, 127
          %v1085 = vpop.permute.xlu0 %1084
          %1086 = vrot.lane.b32.xlu0 %v1083, 127
          %v1087 = vpop.permute.xlu0 %1086
          %v1088 = vsel %vm305, %v1085, %v1087
          %v1090 = vadd.f32 %v1028, %v1088
          %v1092 = vrot.slane %v1090, 2
          %v1094 = vadd.f32 %v1079, %v1092
          %v1095 = vxor.u32 %v1094, 2147483648
          %v1096 = vmul.f32 %v1095, 1.442695
          %v1097 = vpow.pop %v1096
          %v1098 = vadd.f32 %v1097, 1.0
          %v1099 = vrcp.pop %v1098
          %v1100 = vmul.f32 %v1098, %v1099
          %v1101 = vsub.f32 1.0, %v1100
          %v1102 = vmul.f32 %v1099, %v1101
          %v1103 = vadd.f32 %v1099, %v1102
          %vm1104 = vweird.f32 %v1098
          %vm1105 = vweird.f32 %v1099
          %vm1106 = vmor %vm1104, %vm1105
          %v1107 = vsel %vm1106, %v1099, %v1103
          %v1108 = vand.u32 2147483647, %v1098
          %vm1109 = vcmp.eq.f32.partialorder %v1108, 8.507059e+37
          %v1110 = vand.u32 %v1098, 2147483648
          %v1111 = vor.u32 1.1754944e-38, %v1110
          %v1112 = vsel %vm1109, %v1111, %v1107
          %v1113 = vmul.f32 1.0, %v1112
          %1114 = vst [vmem:[%s161] sm:$0xf] %v1113
        $region40: #{tpu_custom_call.1} parent=23 // pred_fallthru
          _
        %s1115 = sand.u32 %s75, 1
        %s1116 = scalar_lea.sflag [#allocation7], %s1115
        %s1117 = sand.u32 %s75, 1
        %s1118 = smul.addr %s1117, 4
        %s1119 = scalar_lea.vmem [#allocation8], %s1118
        // Predicated region
        $region41: #{tpu_custom_call.1} parent=23 // pred_check
          %p1120 = pneg %p85
        $region42: #{tpu_custom_call.1} parent=23 // pred_check_branch
          %1122 = sbr.rel (%p1120) target = $region44
        $region43: #{tpu_custom_call.1} parent=23 // pred_region
          %1124 = vsyncadd %s1116, 0
          %s1125 = smul.addr %s31, 4
          %s1126 = scalar_lea.hbm %s2, %s1125
          %s1128 = sshll.u32 %s1119, 4
          %s1129 = int_to_ptr.vmem [resolvable:$true] %s1128
          %s1130 = sshll.u32 %s1126, 4
          %s1131 = int_to_ptr.hbm [resolvable:$true] %s1130
          %1133 = dma.vmem_to_hbm [thread:$0]  %s1129, 64, %s1131, %s1116
        $region44: #{tpu_custom_call.1} parent=23 // pred_fallthru
          _
      $region24: #{tpu_custom_call.1} parent=5 // pred_fallthru
        _
      %p1134 = scmp.le.s32.totalorder 2, %s22
      // Predicated region
      $region45: #{tpu_custom_call.1} parent=5 // pred_check
        %p1135 = pneg %p1134
      $region46: #{tpu_custom_call.1} parent=5 // pred_check_branch
        %1137 = sbr.rel (%p1135) target = $region48
      $region47: #{tpu_custom_call.1} parent=5 // pred_region
        %s1138 = ssub.s32 %s22, 2
        // Predicated region
        $region49: #{tpu_custom_call.1} parent=47 // pred_check
          %p1139 = pneg %p91
        $region50: #{tpu_custom_call.1} parent=47 // pred_check_branch
          %1141 = sbr.rel (%p1139) target = $region52
        $region51: #{tpu_custom_call.1} parent=47 // pred_region
          %s1142 = sand.u32 %s76, 1
          %s1143 = scalar_lea.sflag [#allocation7], %s1142
          %s1144 = sand.u32 %s76, 1
          %s1145 = smul.addr %s1144, 4
          %s1146 = scalar_lea.vmem [#allocation8], %s1145
          %1148 = dma.done %s1143, 64
        $region52: #{tpu_custom_call.1} parent=47 // pred_fallthru
          _
      $region48: #{tpu_custom_call.1} parent=5 // pred_fallthru
        _
    $region6: #{tpu_custom_call.1} parent=1 // loop_footer
      %s26 = sadd.s32 1, %s22
    $region7: #{tpu_custom_call.1} parent=1 // loop_footer_branch
      %21 = sbr.rel target = $region3
    $region8: #{tpu_custom_call.1} parent=1 // loop_exit
      _
    %1149 = vsyncpa [#allocation6], 1
    %s1150 = scalar_lea.sflag [#allocation6], 1
    %1151 = vsyncpa %s1150, 1
    %1152 = vsyncpa [#allocation7], 1
    %s1153 = scalar_lea.sflag [#allocation7], 1
    %1154 = vsyncpa %s1153, 1

</llo_original>
